<compile_context>
chip_gen: v5e
topology: v5e:2x2
jax: 0.10.0
libtpu: 0.0.40
codegen_flags: <defaults>
</compile_context>

<pallas_src>
import jax
import jax.numpy as jnp
from jax.experimental import pallas as pl
from jax.experimental.pallas import tpu as pltpu


# ---------------------------------------------------------------------------
# In-kernel helpers
# ---------------------------------------------------------------------------
def _pad_hw1(a):
    """Zero-pad a (H, W, C) value by 1 on H and W, using concatenates only."""
    H, W, C = a.shape
    zc = jnp.zeros((H, 1, C), a.dtype)
    a = jnp.concatenate([zc, a, zc], axis=1)          # (H,   W+2, C)
    zr = jnp.zeros((1, W + 2, C), a.dtype)
    return jnp.concatenate([zr, a, zr], axis=0)       # (H+2, W+2, C)


def _im2col3x3(xp, H, W):
    """(H+2, W+2, C) -> (H, W, 9*C): the 9 shifted taps concatenated on lanes.

    Tap order is (kh, kw) row-major, matching the weight flattening in
    `_fold_flatten` below.
    """
    return jnp.concatenate(
        [xp[kh:kh + H, kw:kw + W, :] for kh in range(3) for kw in range(3)],
        axis=-1)


def _basic_conv_block_kernel(x_ref, w1_ref, b1_ref, w2_ref, b2_ref, o_ref):
    # x_ref : (1, H, W, Cin)        one batch element (unpadded)
    # w1_ref: (9*Cin, Cout)         conv1 weights, BN scale folded, im2col order
    # b1_ref: (1, Cout)             conv1 folded BN shift
    # w2_ref: (9*Cout, Cout)        conv2 weights, BN scale folded
    # b2_ref: (1, Cout)             conv2 folded BN shift
    # o_ref : (1, H, W, Cout)
    H = o_ref.shape[1]
    W = o_ref.shape[2]

    # ---- conv unit 1: single MXU contraction with K = 9*Cin ----
    xp = _pad_hw1(x_ref[0].astype(jnp.float32))                  # zero halo, in VMEM
    y1 = jax.lax.dot_general(_im2col3x3(xp, H, W), w1_ref[...],
                             (((2,), (0,)), ((), ())),
                             preferred_element_type=jnp.float32)  # (H, W, Cout)
    y1 = jnp.maximum(y1 + b1_ref[0], 0.0)                        # shift + ReLU

    # ---- conv unit 2: consumes the on-chip conv1 output (no HBM round trip) --
    mp = _pad_hw1(y1)
    y2 = jax.lax.dot_general(_im2col3x3(mp, H, W), w2_ref[...],
                             (((2,), (0,)), ((), ())),
                             preferred_element_type=jnp.float32)  # (H, W, Cout)
    y2 = jnp.maximum(y2 + b2_ref[0], 0.0)
    o_ref[0] = y2.astype(o_ref.dtype)


# ---------------------------------------------------------------------------
# Host-side wrapper
# ---------------------------------------------------------------------------
def _fold_flatten(w, scale):
    """Fold BN scale into conv weights and flatten to im2col layout.

    w: (3, 3, Cin, Cout), scale: (Cout,)  ->  (9*Cin, Cout), row order (kh, kw, ci).
    """
    wf = (w * scale[None, None, None, :]).astype(jnp.float32)
    kh, kw, cin, cout = wf.shape
    return wf.reshape(kh * kw * cin, cout)


def basic_conv_block_fused(x_nhwc, w1f, b1f, w2f, b2f):
    """Fused (conv3x3+BN+ReLU) x2. x_nhwc: (N,H,W,Cin); w*f pre-folded weights."""
    N, H, W, Cin = x_nhwc.shape
    Cout = w1f.shape[-1]

    return pl.pallas_call(
        _basic_conv_block_kernel,
        out_shape=jax.ShapeDtypeStruct((N, H, W, Cout), x_nhwc.dtype),
        grid_spec=pltpu.PrefetchScalarGridSpec(
            num_scalar_prefetch=0,
            grid=(N,),
            in_specs=[
                pl.BlockSpec((1, H, W, Cin), lambda n: (n, 0, 0, 0)),
                pl.BlockSpec((9 * Cin, Cout), lambda n: (0, 0)),
                pl.BlockSpec((1, Cout), lambda n: (0, 0)),
                pl.BlockSpec((9 * Cout, Cout), lambda n: (0, 0)),
                pl.BlockSpec((1, Cout), lambda n: (0, 0)),
            ],
            out_specs=pl.BlockSpec((1, H, W, Cout), lambda n: (n, 0, 0, 0)),
        ),
        compiler_params=pltpu.CompilerParams(
            dimension_semantics=("parallel",)),
    )(x_nhwc, w1f, b1f, w2f, b2f)


class BasicConvBlockPallas:
    """num_convs=2, stride=1, dilation=1, BN(eval)+ReLU, kernel_size=3, padding=1."""

    def __init__(self, in_channels, out_channels, key):
        k = jax.random.split(key, 2)
        eps = 1e-5

        def make_params(kk, cin, cout):
            kw_, kg, kb, km, kv = jax.random.split(kk, 5)
            w = (jax.random.normal(kw_, (3, 3, cin, cout), jnp.float32)
                 * (1.0 / jnp.sqrt(9.0 * cin)))
            gamma = 1.0 + 0.1 * jax.random.normal(kg, (cout,), jnp.float32)
            beta = 0.1 * jax.random.normal(kb, (cout,), jnp.float32)
            mean = 0.1 * jax.random.normal(km, (cout,), jnp.float32)
            var = jnp.abs(jax.random.normal(kv, (cout,), jnp.float32)) + 0.5
            scale = gamma / jnp.sqrt(var + eps)
            shift = beta - mean * scale
            return w, scale, shift

        # Raw params (kept for the reference implementation).
        self.w1, self.scale1, self.shift1 = make_params(k[0], in_channels, out_channels)
        self.w2, self.scale2, self.shift2 = make_params(k[1], out_channels, out_channels)

        # BN scale folded into weights once at parameter-prep time.
        self.w1f = _fold_flatten(self.w1, self.scale1)
        self.w2f = _fold_flatten(self.w2, self.scale2)
        self.b1f = self.shift1.reshape(1, -1).astype(jnp.float32)
        self.b2f = self.shift2.reshape(1, -1).astype(jnp.float32)

    def __call__(self, x_nchw):
        # NCHW (PyTorch convention) -> NHWC for the TPU kernel.
        # TODO(synk): keep the surrounding model NHWC end-to-end to drop these
        #             two full-tensor transpose passes.
        x = jnp.transpose(x_nchw, (0, 2, 3, 1))
        y = basic_conv_block_fused(x, self.w1f, self.b1f, self.w2f, self.b2f)
        return jnp.transpose(y, (0, 3, 1, 2))  # back to NCHW


# ---------------------------------------------------------------------------
# Pure-JAX reference (uses the UNFOLDED params, so it also checks the fold)
# ---------------------------------------------------------------------------
def _reference(x_nchw, block):
    def one(x, w, scale, shift):
        y = jax.lax.conv_general_dilated(
            x, w, window_strides=(1, 1), padding=((1, 1), (1, 1)),
            dimension_numbers=("NCHW", "HWIO", "NCHW"))
        y = y * scale[None, :, None, None] + shift[None, :, None, None]
        return jnp.maximum(y, 0.0)
    y = one(x_nchw, block.w1, block.scale1, block.shift1)
    y = one(y, block.w2, block.scale2, block.shift2)
    return y


if __name__ == "__main__":
    key = jax.random.PRNGKey(0)
    kx, kp = jax.random.split(key)

    N, Cin, H, W = 2, 4, 16, 16
    Cout = 8
    x = jax.random.normal(kx, (N, Cin, H, W), jnp.float32)

    block = BasicConvBlockPallas(Cin, Cout, kp)

    out = jax.block_until_ready(block(x))

    ref = _reference(x, block)
    assert out.shape == (N, Cout, H, W)
    assert jnp.allclose(out, ref, atol=1e-4, rtol=1e-4), "mismatch vs reference"

    print("KERNEL_OK")
</pallas_src>

<mosaic_0001>
module attributes {stable_mosaic.version = 11 : i64} {
  func.func @_basic_conv_block_kernel(%arg0: i32, %arg1: memref<1x16x16x4xf32, #tpu.memory_space<vmem>>, %arg2: memref<36x8xf32, #tpu.memory_space<vmem>>, %arg3: memref<1x8xf32, #tpu.memory_space<vmem>>, %arg4: memref<72x8xf32, #tpu.memory_space<vmem>>, %arg5: memref<1x8xf32, #tpu.memory_space<vmem>>, %arg6: memref<1x16x16x8xf32, #tpu.memory_space<vmem>>) attributes {dimension_semantics = [#tpu.dimension_semantics<parallel>], iteration_bounds = array<i64: 2>, scalar_prefetch = 0 : i64, scratch_operands = 0 : i64, tpu.core_type = #tpu.core_type<tc>, window_params = [{transform_indices = @transform_0, window_bounds = array<i64: 1, 16, 16, 4>}, {pipeline_mode = #tpu.pipeline_mode<synchronous>, transform_indices = @transform_1, window_bounds = array<i64: 36, 8>}, {pipeline_mode = #tpu.pipeline_mode<synchronous>, transform_indices = @transform_2, window_bounds = array<i64: 1, 8>}, {pipeline_mode = #tpu.pipeline_mode<synchronous>, transform_indices = @transform_3, window_bounds = array<i64: 72, 8>}, {pipeline_mode = #tpu.pipeline_mode<synchronous>, transform_indices = @transform_4, window_bounds = array<i64: 1, 8>}, {transform_indices = @transform_5, window_bounds = array<i64: 1, 16, 16, 8>}]} {
    %c0 = arith.constant 0 : index
    %c0_0 = arith.constant 0 : index
    %c0_1 = arith.constant 0 : index
    %c0_2 = arith.constant 0 : index
    %0 = vector.load %arg1[%c0, %c0_0, %c0_1, %c0_2] : memref<1x16x16x4xf32, #tpu.memory_space<vmem>>, vector<1x16x16x4xf32>
    %1 = vector.shape_cast %0 : vector<1x16x16x4xf32> to vector<16x16x4xf32>
    %cst = arith.constant 0.000000e+00 : f32
    %2 = vector.broadcast %cst : f32 to vector<16x1x4xf32>
    %3 = tpu.concatenate %2, %1, %2 in 1 : vector<16x1x4xf32>, vector<16x16x4xf32>, vector<16x1x4xf32> -> vector<16x18x4xf32>
    %cst_3 = arith.constant 0.000000e+00 : f32
    %4 = vector.broadcast %cst_3 : f32 to vector<1x18x4xf32>
    %5 = tpu.concatenate %4, %3, %4 in 0 : vector<1x18x4xf32>, vector<16x18x4xf32>, vector<1x18x4xf32> -> vector<18x18x4xf32>
    %6 = vector.extract_strided_slice %5 {offsets = [0, 0, 0], sizes = [16, 16, 4], strides = [1, 1, 1]} : vector<18x18x4xf32> to vector<16x16x4xf32>
    %7 = vector.extract_strided_slice %5 {offsets = [0, 1, 0], sizes = [16, 16, 4], strides = [1, 1, 1]} : vector<18x18x4xf32> to vector<16x16x4xf32>
    %8 = vector.extract_strided_slice %5 {offsets = [0, 2, 0], sizes = [16, 16, 4], strides = [1, 1, 1]} : vector<18x18x4xf32> to vector<16x16x4xf32>
    %9 = vector.extract_strided_slice %5 {offsets = [1, 0, 0], sizes = [16, 16, 4], strides = [1, 1, 1]} : vector<18x18x4xf32> to vector<16x16x4xf32>
    %10 = vector.extract_strided_slice %5 {offsets = [1, 1, 0], sizes = [16, 16, 4], strides = [1, 1, 1]} : vector<18x18x4xf32> to vector<16x16x4xf32>
    %11 = vector.extract_strided_slice %5 {offsets = [1, 2, 0], sizes = [16, 16, 4], strides = [1, 1, 1]} : vector<18x18x4xf32> to vector<16x16x4xf32>
    %12 = vector.extract_strided_slice %5 {offsets = [2, 0, 0], sizes = [16, 16, 4], strides = [1, 1, 1]} : vector<18x18x4xf32> to vector<16x16x4xf32>
    %13 = vector.extract_strided_slice %5 {offsets = [2, 1, 0], sizes = [16, 16, 4], strides = [1, 1, 1]} : vector<18x18x4xf32> to vector<16x16x4xf32>
    %14 = vector.extract_strided_slice %5 {offsets = [2, 2, 0], sizes = [16, 16, 4], strides = [1, 1, 1]} : vector<18x18x4xf32> to vector<16x16x4xf32>
    %15 = tpu.concatenate %6, %7, %8, %9, %10, %11, %12, %13, %14 in 2 : vector<16x16x4xf32>, vector<16x16x4xf32>, vector<16x16x4xf32>, vector<16x16x4xf32>, vector<16x16x4xf32>, vector<16x16x4xf32>, vector<16x16x4xf32>, vector<16x16x4xf32>, vector<16x16x4xf32> -> vector<16x16x36xf32>
    %c0_4 = arith.constant 0 : index
    %c0_5 = arith.constant 0 : index
    %16 = vector.load %arg2[%c0_4, %c0_5] : memref<36x8xf32, #tpu.memory_space<vmem>>, vector<36x8xf32>
    %cst_6 = arith.constant dense<0.000000e+00> : vector<16x16x8xf32>
    %17 = tpu.matmul %15, %16, %cst_6 {dimension_numbers = #tpu.dot_dimension_numbers<[2], [0], [0, 1], [1], [0, 0, 0, 1, 1, 1], [], []>} : vector<16x16x36xf32>, vector<36x8xf32>, vector<16x16x8xf32> -> vector<16x16x8xf32>
    %c0_7 = arith.constant 0 : index
    %c0_8 = arith.constant 0 : index
    %18 = vector.load %arg3[%c0_7, %c0_8] : memref<1x8xf32, #tpu.memory_space<vmem>>, vector<1x8xf32>
    %19 = vector.shape_cast %18 : vector<1x8xf32> to vector<8xf32>
    %20 = vector.shape_cast %19 : vector<8xf32> to vector<1x1x8xf32>
    %21 = vector.broadcast %20 : vector<1x1x8xf32> to vector<16x16x8xf32>
    %22 = arith.addf %17, %21 : vector<16x16x8xf32>
    %cst_9 = arith.constant 0.000000e+00 : f32
    %23 = vector.broadcast %cst_9 : f32 to vector<16x16x8xf32>
    %24 = arith.maximumf %22, %23 : vector<16x16x8xf32>
    %cst_10 = arith.constant 0.000000e+00 : f32
    %25 = vector.broadcast %cst_10 : f32 to vector<16x1x8xf32>
    %26 = tpu.concatenate %25, %24, %25 in 1 : vector<16x1x8xf32>, vector<16x16x8xf32>, vector<16x1x8xf32> -> vector<16x18x8xf32>
    %cst_11 = arith.constant 0.000000e+00 : f32
    %27 = vector.broadcast %cst_11 : f32 to vector<1x18x8xf32>
    %28 = tpu.concatenate %27, %26, %27 in 0 : vector<1x18x8xf32>, vector<16x18x8xf32>, vector<1x18x8xf32> -> vector<18x18x8xf32>
    %29 = vector.extract_strided_slice %28 {offsets = [0, 0, 0], sizes = [16, 16, 8], strides = [1, 1, 1]} : vector<18x18x8xf32> to vector<16x16x8xf32>
    %30 = vector.extract_strided_slice %28 {offsets = [0, 1, 0], sizes = [16, 16, 8], strides = [1, 1, 1]} : vector<18x18x8xf32> to vector<16x16x8xf32>
    %31 = vector.extract_strided_slice %28 {offsets = [0, 2, 0], sizes = [16, 16, 8], strides = [1, 1, 1]} : vector<18x18x8xf32> to vector<16x16x8xf32>
    %32 = vector.extract_strided_slice %28 {offsets = [1, 0, 0], sizes = [16, 16, 8], strides = [1, 1, 1]} : vector<18x18x8xf32> to vector<16x16x8xf32>
    %33 = vector.extract_strided_slice %28 {offsets = [1, 1, 0], sizes = [16, 16, 8], strides = [1, 1, 1]} : vector<18x18x8xf32> to vector<16x16x8xf32>
    %34 = vector.extract_strided_slice %28 {offsets = [1, 2, 0], sizes = [16, 16, 8], strides = [1, 1, 1]} : vector<18x18x8xf32> to vector<16x16x8xf32>
    %35 = vector.extract_strided_slice %28 {offsets = [2, 0, 0], sizes = [16, 16, 8], strides = [1, 1, 1]} : vector<18x18x8xf32> to vector<16x16x8xf32>
    %36 = vector.extract_strided_slice %28 {offsets = [2, 1, 0], sizes = [16, 16, 8], strides = [1, 1, 1]} : vector<18x18x8xf32> to vector<16x16x8xf32>
    %37 = vector.extract_strided_slice %28 {offsets = [2, 2, 0], sizes = [16, 16, 8], strides = [1, 1, 1]} : vector<18x18x8xf32> to vector<16x16x8xf32>
    %38 = tpu.concatenate %29, %30, %31, %32, %33, %34, %35, %36, %37 in 2 : vector<16x16x8xf32>, vector<16x16x8xf32>, vector<16x16x8xf32>, vector<16x16x8xf32>, vector<16x16x8xf32>, vector<16x16x8xf32>, vector<16x16x8xf32>, vector<16x16x8xf32>, vector<16x16x8xf32> -> vector<16x16x72xf32>
    %c0_12 = arith.constant 0 : index
    %c0_13 = arith.constant 0 : index
    %39 = vector.load %arg4[%c0_12, %c0_13] : memref<72x8xf32, #tpu.memory_space<vmem>>, vector<72x8xf32>
    %cst_14 = arith.constant dense<0.000000e+00> : vector<16x16x8xf32>
    %40 = tpu.matmul %38, %39, %cst_14 {dimension_numbers = #tpu.dot_dimension_numbers<[2], [0], [0, 1], [1], [0, 0, 0, 1, 1, 1], [], []>} : vector<16x16x72xf32>, vector<72x8xf32>, vector<16x16x8xf32> -> vector<16x16x8xf32>
    %c0_15 = arith.constant 0 : index
    %c0_16 = arith.constant 0 : index
    %41 = vector.load %arg5[%c0_15, %c0_16] : memref<1x8xf32, #tpu.memory_space<vmem>>, vector<1x8xf32>
    %42 = vector.shape_cast %41 : vector<1x8xf32> to vector<8xf32>
    %43 = vector.shape_cast %42 : vector<8xf32> to vector<1x1x8xf32>
    %44 = vector.broadcast %43 : vector<1x1x8xf32> to vector<16x16x8xf32>
    %45 = arith.addf %40, %44 : vector<16x16x8xf32>
    %cst_17 = arith.constant 0.000000e+00 : f32
    %46 = vector.broadcast %cst_17 : f32 to vector<16x16x8xf32>
    %47 = arith.maximumf %45, %46 : vector<16x16x8xf32>
    %c0_18 = arith.constant 0 : index
    %c0_19 = arith.constant 0 : index
    %c0_20 = arith.constant 0 : index
    %c0_21 = arith.constant 0 : index
    %48 = vector.load %arg6[%c0_18, %c0_19, %c0_20, %c0_21] : memref<1x16x16x8xf32, #tpu.memory_space<vmem>>, vector<1x16x16x8xf32>
    %49 = vector.shape_cast %48 : vector<1x16x16x8xf32> to vector<16x16x8xf32>
    %50 = vector.shape_cast %47 : vector<16x16x8xf32> to vector<1x16x16x8xf32>
    tpu.vector_store %arg6[%c0_18, %c0_19, %c0_20, %c0_21], %50 {strides = array<i32>} : memref<1x16x16x8xf32, #tpu.memory_space<vmem>>, vector<1x16x16x8xf32>,
    return
  }
  func.func @transform_0(%arg0: i32) -> (i32, i32, i32, i32) {
    %c0_i32 = arith.constant 0 : i32
    %c0_i32_0 = arith.constant 0 : i32
    %c0_i32_1 = arith.constant 0 : i32
    %c0_i32_2 = arith.constant 0 : i32
    return %arg0, %c0_i32, %c0_i32_0, %c0_i32_1 : i32, i32, i32, i32
  }
  func.func @transform_1(%arg0: i32) -> (i32, i32) {
    %c0_i32 = arith.constant 0 : i32
    %c0_i32_0 = arith.constant 0 : i32
    %c0_i32_1 = arith.constant 0 : i32
    return %c0_i32, %c0_i32_0 : i32, i32
  }
  func.func @transform_2(%arg0: i32) -> (i32, i32) {
    %c0_i32 = arith.constant 0 : i32
    %c0_i32_0 = arith.constant 0 : i32
    %c0_i32_1 = arith.constant 0 : i32
    return %c0_i32, %c0_i32_0 : i32, i32
  }
  func.func @transform_3(%arg0: i32) -> (i32, i32) {
    %c0_i32 = arith.constant 0 : i32
    %c0_i32_0 = arith.constant 0 : i32
    %c0_i32_1 = arith.constant 0 : i32
    return %c0_i32, %c0_i32_0 : i32, i32
  }
  func.func @transform_4(%arg0: i32) -> (i32, i32) {
    %c0_i32 = arith.constant 0 : i32
    %c0_i32_0 = arith.constant 0 : i32
    %c0_i32_1 = arith.constant 0 : i32
    return %c0_i32, %c0_i32_0 : i32, i32
  }
  func.func @transform_5(%arg0: i32) -> (i32, i32, i32, i32) {
    %c0_i32 = arith.constant 0 : i32
    %c0_i32_0 = arith.constant 0 : i32
    %c0_i32_1 = arith.constant 0 : i32
    %c0_i32_2 = arith.constant 0 : i32
    return %arg0, %c0_i32, %c0_i32_0, %c0_i32_1 : i32, i32, i32, i32
  }
}

</mosaic_0001>

<llo_original>
// kernel: tpu_custom_call.1
$region0: #{tpu_custom_call.1}
  #allocation0 [shape = 'u32[]', space=smem, size = 0x4, offset = 0x4, fixed_abs, tag = 'smem constant byte address 0x4 - core index']
  #allocation1 [shape = 'u32[72,128]{1,0:T(1,128)}', space=vmem, size = 0x9000, scoped, tag = 'internal scratch']
  %s0 = inlined_call_operand.vmem [shape: f32[2,16,16,4], index: 0, kind: input, shape index: {}]
  %s1 = inlined_call_operand.vmem [shape: f32[36,8], index: 1, kind: input, shape index: {}]
  %s2 = inlined_call_operand.vmem [shape: f32[1,8], index: 2, kind: input, shape index: {}]
  %s3 = inlined_call_operand.vmem [shape: f32[72,8], index: 3, kind: input, shape index: {}]
  %s4 = inlined_call_operand.vmem [shape: f32[1,8], index: 4, kind: input, shape index: {}]
  %s5 = inlined_call_operand.vmem [shape: f32[2,16,16,8], index: 5, kind: output, shape index: {}]
  %s6 = sld [smem:[#allocation0]]
  $region53: #{tpu_custom_call.1} parent=0
    _
  %s8 = ssub.s32 1, %s6
  %s9 = scalar_select 0, %s8, %s6
  loop: start=0, step=1, limit=4
  $region2: #{tpu_custom_call.1} parent=0 // loop_pre_header
    _
  $region3: #{tpu_custom_call.1} parent=0 // loop_header
    %s11 = sphi 0, %s15
    %p12 = scmp.ge.s32.totalorder %s11, 4
    %s21 = sphi 0, %s23
    %s24 = sphi 0, %s21
    %s25 = sphi 0, %s24
    %s41 = sphi 0, %s25
    %s45 = sphi 0, %s45
    %s47 = sphi 0, %s45
    %s48 = sphi 0, %s47
    %s62 = sphi 0, %s48
    %s66 = sphi 0, %s66
    %s68 = sphi 0, %s66
    %s69 = sphi 0, %s68
    %s83 = sphi 0, %s69
    %s87 = sphi 0, %s87
    %s89 = sphi 0, %s87
    %s90 = sphi 0, %s89
    %s104 = sphi 0, %s90
    %s108 = sphi 0, %s108
    %s110 = sphi 0, %s108
    %s111 = sphi 0, %s110
    %s125 = sphi 0, %s111
    %s131 = sphi 0, %s133
    %s134 = sphi 0, %s131
    %s135 = sphi 0, %s134
    %s151 = sphi 0, %s135
  $region4: #{tpu_custom_call.1} parent=0 // loop_header_branch
    %14 = sbr.rel (%p12) target = $region8
  $region5: #{tpu_custom_call.1} parent=0 // loop_body
    %s16 = ssub.s32 %s11, 1
    %s17 = ssub.s32 %s11, 2
    %s18 = sadd.s32 %s11, 1
    %s19 = ssub.s32 %s11, %s18
    %p20 = scmp.eq.s32.totalorder %s19, 0
    %s22 = sadd.s32 %s21, 1
    %s23 = scalar_select %p20, %s21, %s22
    %p26 = pneg %p20
    %p27 = scmp.eq.s32.totalorder %s11, 1
    %p28 = por %p26, %p27
    %p29 = scmp.ne.s32.totalorder %s21, %s24
    %p30 = scmp.eq.s32.totalorder %s11, 0
    %p31 = por %p29, %p30
    %p32 = scmp.ne.s32.totalorder %s21, %s24
    %p33 = scmp.eq.s32.totalorder %s16, 1
    %p34 = por %p32, %p33
    %p35 = scmp.ne.s32.totalorder %s24, %s25
    %p36 = scmp.eq.s32.totalorder %s16, 0
    %p37 = por %p35, %p36
    %p38 = scmp.ne.s32.totalorder %s24, %s25
    %p39 = scmp.eq.s32.totalorder %s17, 1
    %p40 = por %p38, %p39
    %p42 = scmp.ne.s32.totalorder %s25, %s41
    %p43 = scmp.eq.s32.totalorder %s17, 0
    %p44 = por %p42, %p43
    %s46 = sadd.s32 %s45, 1
    %p49 = scmp.eq.s32.totalorder %s11, 1
    %p50 = scmp.ne.s32.totalorder %s45, %s47
    %p51 = scmp.eq.s32.totalorder %s11, 0
    %p52 = por %p50, %p51
    %p53 = scmp.ne.s32.totalorder %s45, %s47
    %p54 = scmp.eq.s32.totalorder %s16, 1
    %p55 = por %p53, %p54
    %p56 = scmp.ne.s32.totalorder %s47, %s48
    %p57 = scmp.eq.s32.totalorder %s16, 0
    %p58 = por %p56, %p57
    %p59 = scmp.ne.s32.totalorder %s47, %s48
    %p60 = scmp.eq.s32.totalorder %s17, 1
    %p61 = por %p59, %p60
    %p63 = scmp.ne.s32.totalorder %s48, %s62
    %p64 = scmp.eq.s32.totalorder %s17, 0
    %p65 = por %p63, %p64
    %s67 = sadd.s32 %s66, 1
    %p70 = scmp.eq.s32.totalorder %s11, 1
    %p71 = scmp.ne.s32.totalorder %s66, %s68
    %p72 = scmp.eq.s32.totalorder %s11, 0
    %p73 = por %p71, %p72
    %p74 = scmp.ne.s32.totalorder %s66, %s68
    %p75 = scmp.eq.s32.totalorder %s16, 1
    %p76 = por %p74, %p75
    %p77 = scmp.ne.s32.totalorder %s68, %s69
    %p78 = scmp.eq.s32.totalorder %s16, 0
    %p79 = por %p77, %p78
    %p80 = scmp.ne.s32.totalorder %s68, %s69
    %p81 = scmp.eq.s32.totalorder %s17, 1
    %p82 = por %p80, %p81
    %p84 = scmp.ne.s32.totalorder %s69, %s83
    %p85 = scmp.eq.s32.totalorder %s17, 0
    %p86 = por %p84, %p85
    %s88 = sadd.s32 %s87, 1
    %p91 = scmp.eq.s32.totalorder %s11, 1
    %p92 = scmp.ne.s32.totalorder %s87, %s89
    %p93 = scmp.eq.s32.totalorder %s11, 0
    %p94 = por %p92, %p93
    %p95 = scmp.ne.s32.totalorder %s87, %s89
    %p96 = scmp.eq.s32.totalorder %s16, 1
    %p97 = por %p95, %p96
    %p98 = scmp.ne.s32.totalorder %s89, %s90
    %p99 = scmp.eq.s32.totalorder %s16, 0
    %p100 = por %p98, %p99
    %p101 = scmp.ne.s32.totalorder %s89, %s90
    %p102 = scmp.eq.s32.totalorder %s17, 1
    %p103 = por %p101, %p102
    %p105 = scmp.ne.s32.totalorder %s90, %s104
    %p106 = scmp.eq.s32.totalorder %s17, 0
    %p107 = por %p105, %p106
    %s109 = sadd.s32 %s108, 1
    %p112 = scmp.eq.s32.totalorder %s11, 1
    %p113 = scmp.ne.s32.totalorder %s108, %s110
    %p114 = scmp.eq.s32.totalorder %s11, 0
    %p115 = por %p113, %p114
    %p116 = scmp.ne.s32.totalorder %s108, %s110
    %p117 = scmp.eq.s32.totalorder %s16, 1
    %p118 = por %p116, %p117
    %p119 = scmp.ne.s32.totalorder %s110, %s111
    %p120 = scmp.eq.s32.totalorder %s16, 0
    %p121 = por %p119, %p120
    %p122 = scmp.ne.s32.totalorder %s110, %s111
    %p123 = scmp.eq.s32.totalorder %s17, 1
    %p124 = por %p122, %p123
    %p126 = scmp.ne.s32.totalorder %s111, %s125
    %p127 = scmp.eq.s32.totalorder %s17, 0
    %p128 = por %p126, %p127
    %s129 = ssub.s32 %s11, %s18
    %p130 = scmp.eq.s32.totalorder %s129, 0
    %s132 = sadd.s32 %s131, 1
    %s133 = scalar_select %p130, %s131, %s132
    %p136 = pneg %p130
    %p137 = scmp.eq.s32.totalorder %s11, 1
    %p138 = por %p136, %p137
    %p139 = scmp.ne.s32.totalorder %s131, %s134
    %p140 = scmp.eq.s32.totalorder %s11, 0
    %p141 = por %p139, %p140
    %p142 = scmp.ne.s32.totalorder %s131, %s134
    %p143 = scmp.eq.s32.totalorder %s16, 1
    %p144 = por %p142, %p143
    %p145 = scmp.ne.s32.totalorder %s134, %s135
    %p146 = scmp.eq.s32.totalorder %s16, 0
    %p147 = por %p145, %p146
    %p148 = scmp.ne.s32.totalorder %s134, %s135
    %p149 = scmp.eq.s32.totalorder %s17, 1
    %p150 = por %p148, %p149
    %p152 = scmp.ne.s32.totalorder %s135, %s151
    %p153 = scmp.eq.s32.totalorder %s17, 0
    %p154 = por %p152, %p153
    %p155 = scmp.le.s32.totalorder 1, %s11
    %p156 = scmp.lt.s32.totalorder %s11, 3
    %p157 = pnand %p155, %p156
    %p158 = pneg %p157
    // Predicated region
    $region9: #{tpu_custom_call.1} parent=5 // pred_check
      _
    $region10: #{tpu_custom_call.1} parent=5 // pred_check_branch
      %160 = sbr.rel (%p157) target = $region12
    $region11: #{tpu_custom_call.1} parent=5 // pred_region
      %s161 = ssub.s32 %s11, 1
      // Predicated region
      $region13: #{tpu_custom_call.1} parent=11 // pred_check
        %p162 = pneg %p58
      $region14: #{tpu_custom_call.1} parent=11 // pred_check_branch
        %164 = sbr.rel (%p162) target = $region16
      $region15: #{tpu_custom_call.1} parent=11 // pred_region
        _
      $region16: #{tpu_custom_call.1} parent=11 // pred_fallthru
        _
      // Predicated region
      $region17: #{tpu_custom_call.1} parent=11 // pred_check
        %p165 = pneg %p79
      $region18: #{tpu_custom_call.1} parent=11 // pred_check_branch
        %167 = sbr.rel (%p165) target = $region20
      $region19: #{tpu_custom_call.1} parent=11 // pred_region
        _
      $region20: #{tpu_custom_call.1} parent=11 // pred_fallthru
        _
      // Predicated region
      $region21: #{tpu_custom_call.1} parent=11 // pred_check
        %p168 = pneg %p100
      $region22: #{tpu_custom_call.1} parent=11 // pred_check_branch
        %170 = sbr.rel (%p168) target = $region24
      $region23: #{tpu_custom_call.1} parent=11 // pred_region
        _
      $region24: #{tpu_custom_call.1} parent=11 // pred_fallthru
        _
      // Predicated region
      $region25: #{tpu_custom_call.1} parent=11 // pred_check
        %p171 = pneg %p121
      $region26: #{tpu_custom_call.1} parent=11 // pred_check_branch
        %173 = sbr.rel (%p171) target = $region28
      $region27: #{tpu_custom_call.1} parent=11 // pred_region
        _
      $region28: #{tpu_custom_call.1} parent=11 // pred_fallthru
        _
    $region12: #{tpu_custom_call.1} parent=5 // pred_fallthru
      _
    %p174 = scmp.lt.s32.totalorder %s11, 2
    // Predicated region
    $region29: #{tpu_custom_call.1} parent=5 // pred_check
      %p175 = pneg %p174
    $region30: #{tpu_custom_call.1} parent=5 // pred_check_branch
      %177 = sbr.rel (%p175) target = $region32
    $region31: #{tpu_custom_call.1} parent=5 // pred_region
      // Predicated region
      $region33: #{tpu_custom_call.1} parent=31 // pred_check
        %p178 = pneg %p31
      $region34: #{tpu_custom_call.1} parent=31 // pred_check_branch
        %180 = sbr.rel (%p178) target = $region36
      $region35: #{tpu_custom_call.1} parent=31 // pred_region
        %p181 = scmp.lt.s32.totalorder %s11, 1
        %s182 = scalar_select %p181, %s11, 1
        %s183 = smul.addr %s182, 32
        %s184 = smul.addr %s183, 8
        %s185 = scalar_lea.vmem %s0, %s184
      $region36: #{tpu_custom_call.1} parent=31 // pred_fallthru
        _
    $region32: #{tpu_custom_call.1} parent=5 // pred_fallthru
      _
    %p186 = scmp.le.s32.totalorder 1, %s11
    %p187 = scmp.lt.s32.totalorder %s11, 3
    %p188 = pnand %p186, %p187
    %p189 = pneg %p188
    // Predicated region
    $region37: #{tpu_custom_call.1} parent=5 // pred_check
      _
    $region38: #{tpu_custom_call.1} parent=5 // pred_check_branch
      %191 = sbr.rel (%p188) target = $region40
    $region39: #{tpu_custom_call.1} parent=5 // pred_region
      %s192 = ssub.s32 %s11, 1
      %p193 = scmp.lt.s32.totalorder %s16, 1
      %s194 = scalar_select %p193, %s16, 1
      %s195 = smul.addr %s194, 32
      %s196 = smul.addr %s195, 8
      %s197 = scalar_lea.vmem %s0, %s196
      %p198 = pneg %p37
      %p199 = pneg %p34
      %p200 = pneg %p58
      %p201 = pneg %p55
      %p202 = pneg %p79
      %p203 = pneg %p76
      %p204 = pneg %p100
      %p205 = pneg %p97
      %p206 = pneg %p121
      %p207 = pneg %p118
      %p208 = pneg %p147
      %p209 = pneg %p144
      %p210 = scmp.lt.s32.totalorder %s16, 1
      %s211 = scalar_select %p210, %s16, 1
      %s212 = smul.addr %s211, 32
      %s213 = smul.addr %s212, 8
      %s214 = scalar_lea.vmem %s5, %s213
      %p215 = scmp.lt.s32.totalorder %s16, 1
      %s216 = scalar_select %p215, %s16, 1
      %s217 = smul.addr %s216, 32
      %s218 = smul.addr %s217, 8
      %s219 = scalar_lea.vmem %s0, %s218
      %p220 = scmp.lt.s32.totalorder %s16, 1
      %s221 = scalar_select %p220, %s16, 1
      %s222 = smul.addr %s221, 32
      %s223 = smul.addr %s222, 8
      %s224 = scalar_lea.vmem %s5, %s223
      %v225 = vld [vmem:[%s219] sm:$0xff]
      %v226 = vld [vmem:[%s219 + $0x8] sm:$0xff]
      %v227 = vld [vmem:[%s219 + $0x10] sm:$0xff]
      %v228 = vld [vmem:[%s219 + $0x18] sm:$0xff]
      %v229 = vld [vmem:[%s219 + $0x20] sm:$0xff]
      %v230 = vld [vmem:[%s219 + $0x28] sm:$0xff]
      %v231 = vld [vmem:[%s219 + $0x30] sm:$0xff]
      %v232 = vld [vmem:[%s219 + $0x38] sm:$0xff]
      %v233 = vld [vmem:[%s219 + $0x40] sm:$0xff]
      %v234 = vld [vmem:[%s219 + $0x48] sm:$0xff]
      %v235 = vld [vmem:[%s219 + $0x50] sm:$0xff]
      %v236 = vld [vmem:[%s219 + $0x58] sm:$0xff]
      %v237 = vld [vmem:[%s219 + $0x60] sm:$0xff]
      %v238 = vld [vmem:[%s219 + $0x68] sm:$0xff]
      %v239 = vld [vmem:[%s219 + $0x70] sm:$0xff]
      %v240 = vld [vmem:[%s219 + $0x78] sm:$0xff]
      %v241 = vld [vmem:[%s219 + $0x80] sm:$0xff]
      %v242 = vld [vmem:[%s219 + $0x88] sm:$0xff]
      %v243 = vld [vmem:[%s219 + $0x90] sm:$0xff]
      %v244 = vld [vmem:[%s219 + $0x98] sm:$0xff]
      %v245 = vld [vmem:[%s219 + $0xa0] sm:$0xff]
      %v246 = vld [vmem:[%s219 + $0xa8] sm:$0xff]
      %v247 = vld [vmem:[%s219 + $0xb0] sm:$0xff]
      %v248 = vld [vmem:[%s219 + $0xb8] sm:$0xff]
      %v249 = vld [vmem:[%s219 + $0xc0] sm:$0xff]
      %v250 = vld [vmem:[%s219 + $0xc8] sm:$0xff]
      %v251 = vld [vmem:[%s219 + $0xd0] sm:$0xff]
      %v252 = vld [vmem:[%s219 + $0xd8] sm:$0xff]
      %v253 = vld [vmem:[%s219 + $0xe0] sm:$0xff]
      %v254 = vld [vmem:[%s219 + $0xe8] sm:$0xff]
      %v255 = vld [vmem:[%s219 + $0xf0] sm:$0xff]
      %v256 = vld [vmem:[%s219 + $0xf8] sm:$0xff]
      %vm289 = vcmask 1040384
      %v290 = vrot.slane %v225, 7
      %v291 = vrot.slane %v226, 7
      %v292 = vsel %vm289, %v290, %v291
      %v293 = vrot.slane %v227, 7
      %v294 = vrot.slane %v228, 7
      %v295 = vsel %vm289, %v293, %v294
      %v296 = vrot.slane %v229, 7
      %v297 = vrot.slane %v230, 7
      %v298 = vsel %vm289, %v296, %v297
      %v299 = vrot.slane %v231, 7
      %v300 = vrot.slane %v232, 7
      %v301 = vsel %vm289, %v299, %v300
      %v302 = vrot.slane %v233, 7
      %v303 = vrot.slane %v234, 7
      %v304 = vsel %vm289, %v302, %v303
      %v305 = vrot.slane %v235, 7
      %v306 = vrot.slane %v236, 7
      %v307 = vsel %vm289, %v305, %v306
      %v308 = vrot.slane %v237, 7
      %v309 = vrot.slane %v238, 7
      %v310 = vsel %vm289, %v308, %v309
      %v311 = vrot.slane %v239, 7
      %v312 = vrot.slane %v240, 7
      %v313 = vsel %vm289, %v311, %v312
      %v314 = vrot.slane %v241, 7
      %v315 = vrot.slane %v242, 7
      %v316 = vsel %vm289, %v314, %v315
      %v317 = vrot.slane %v243, 7
      %v318 = vrot.slane %v244, 7
      %v319 = vsel %vm289, %v317, %v318
      %v320 = vrot.slane %v245, 7
      %v321 = vrot.slane %v246, 7
      %v322 = vsel %vm289, %v320, %v321
      %v323 = vrot.slane %v247, 7
      %v324 = vrot.slane %v248, 7
      %v325 = vsel %vm289, %v323, %v324
      %v326 = vrot.slane %v249, 7
      %v327 = vrot.slane %v250, 7
      %v328 = vsel %vm289, %v326, %v327
      %v329 = vrot.slane %v251, 7
      %v330 = vrot.slane %v252, 7
      %v331 = vsel %vm289, %v329, %v330
      %v332 = vrot.slane %v253, 7
      %v333 = vrot.slane %v254, 7
      %v334 = vsel %vm289, %v332, %v333
      %v335 = vrot.slane %v255, 7
      %v336 = vrot.slane %v256, 7
      %v337 = vsel %vm289, %v335, %v336
      %v385 = vsel %vm289, 0.0, %v290
      %v386 = vsel %vm289, 0.0, %v293
      %v387 = vsel %vm289, 0.0, %v296
      %v388 = vsel %vm289, 0.0, %v299
      %v389 = vsel %vm289, 0.0, %v302
      %v390 = vsel %vm289, 0.0, %v305
      %v391 = vsel %vm289, 0.0, %v308
      %v392 = vsel %vm289, 0.0, %v311
      %v393 = vsel %vm289, 0.0, %v314
      %v394 = vsel %vm289, 0.0, %v317
      %v395 = vsel %vm289, 0.0, %v320
      %v396 = vsel %vm289, 0.0, %v323
      %v397 = vsel %vm289, 0.0, %v326
      %v398 = vsel %vm289, 0.0, %v329
      %v399 = vsel %vm289, 0.0, %v332
      %v400 = vsel %vm289, 0.0, %v335
      %v401 = vsel %vm289, %v291, 0.0
      %v402 = vsel %vm289, %v294, 0.0
      %v403 = vsel %vm289, %v297, 0.0
      %v404 = vsel %vm289, %v300, 0.0
      %v405 = vsel %vm289, %v303, 0.0
      %v406 = vsel %vm289, %v306, 0.0
      %v407 = vsel %vm289, %v309, 0.0
      %v408 = vsel %vm289, %v312, 0.0
      %v409 = vsel %vm289, %v315, 0.0
      %v410 = vsel %vm289, %v318, 0.0
      %v411 = vsel %vm289, %v321, 0.0
      %v412 = vsel %vm289, %v324, 0.0
      %v413 = vsel %vm289, %v327, 0.0
      %v414 = vsel %vm289, %v330, 0.0
      %v415 = vsel %vm289, %v333, 0.0
      %v416 = vsel %vm289, %v336, 0.0
      %vm448 = vcmask 1046528
      %v449 = vrot.slane 0.0, 1
      %v450 = vsel %vm448, %v449, %v449
      %v451 = vrot.slane %v385, 1
      %v452 = vrot.slane %v292, 1
      %v453 = vsel %vm448, %v451, %v452
      %v454 = vrot.slane %v401, 1
      %v455 = vsel %vm448, %v452, %v454
      %v456 = vrot.slane %v386, 1
      %v457 = vrot.slane %v295, 1
      %v458 = vsel %vm448, %v456, %v457
      %v459 = vrot.slane %v402, 1
      %v460 = vsel %vm448, %v457, %v459
      %v461 = vrot.slane %v387, 1
      %v462 = vrot.slane %v298, 1
      %v463 = vsel %vm448, %v461, %v462
      %v464 = vrot.slane %v403, 1
      %v465 = vsel %vm448, %v462, %v464
      %v466 = vrot.slane %v388, 1
      %v467 = vrot.slane %v301, 1
      %v468 = vsel %vm448, %v466, %v467
      %v469 = vrot.slane %v404, 1
      %v470 = vsel %vm448, %v467, %v469
      %v471 = vrot.slane %v389, 1
      %v472 = vrot.slane %v304, 1
      %v473 = vsel %vm448, %v471, %v472
      %v474 = vrot.slane %v405, 1
      %v475 = vsel %vm448, %v472, %v474
      %v476 = vrot.slane %v390, 1
      %v477 = vrot.slane %v307, 1
      %v478 = vsel %vm448, %v476, %v477
      %v479 = vrot.slane %v406, 1
      %v480 = vsel %vm448, %v477, %v479
      %v481 = vrot.slane %v391, 1
      %v482 = vrot.slane %v310, 1
      %v483 = vsel %vm448, %v481, %v482
      %v484 = vrot.slane %v407, 1
      %v485 = vsel %vm448, %v482, %v484
      %v486 = vrot.slane %v392, 1
      %v487 = vrot.slane %v313, 1
      %v488 = vsel %vm448, %v486, %v487
      %v489 = vrot.slane %v408, 1
      %v490 = vsel %vm448, %v487, %v489
      %v491 = vrot.slane %v393, 1
      %v492 = vrot.slane %v316, 1
      %v493 = vsel %vm448, %v491, %v492
      %v494 = vrot.slane %v409, 1
      %v495 = vsel %vm448, %v492, %v494
      %v496 = vrot.slane %v394, 1
      %v497 = vrot.slane %v319, 1
      %v498 = vsel %vm448, %v496, %v497
      %v499 = vrot.slane %v410, 1
      %v500 = vsel %vm448, %v497, %v499
      %v501 = vrot.slane %v395, 1
      %v502 = vrot.slane %v322, 1
      %v503 = vsel %vm448, %v501, %v502
      %v504 = vrot.slane %v411, 1
      %v505 = vsel %vm448, %v502, %v504
      %v506 = vrot.slane %v396, 1
      %v507 = vrot.slane %v325, 1
      %v508 = vsel %vm448, %v506, %v507
      %v509 = vrot.slane %v412, 1
      %v510 = vsel %vm448, %v507, %v509
      %v511 = vrot.slane %v397, 1
      %v512 = vrot.slane %v328, 1
      %v513 = vsel %vm448, %v511, %v512
      %v514 = vrot.slane %v413, 1
      %v515 = vsel %vm448, %v512, %v514
      %v516 = vrot.slane %v398, 1
      %v517 = vrot.slane %v331, 1
      %v518 = vsel %vm448, %v516, %v517
      %v519 = vrot.slane %v414, 1
      %v520 = vsel %vm448, %v517, %v519
      %v521 = vrot.slane %v399, 1
      %v522 = vrot.slane %v334, 1
      %v523 = vsel %vm448, %v521, %v522
      %v524 = vrot.slane %v415, 1
      %v525 = vsel %vm448, %v522, %v524
      %526 = vrot.lane.b32.xlu0 %v450, 4
      %v527 = vpop.permute.xlu0 %526
      %528 = vrot.lane.b32.xlu0 %v453, 4
      %v529 = vpop.permute.xlu0 %528
      %530 = vrot.lane.b32.xlu0 %v455, 4
      %v531 = vpop.permute.xlu0 %530
      %532 = vrot.lane.b32.xlu0 %v458, 4
      %v533 = vpop.permute.xlu0 %532
      %534 = vrot.lane.b32.xlu0 %v460, 4
      %v535 = vpop.permute.xlu0 %534
      %536 = vrot.lane.b32.xlu0 %v463, 4
      %v537 = vpop.permute.xlu0 %536
      %538 = vrot.lane.b32.xlu0 %v465, 4
      %v539 = vpop.permute.xlu0 %538
      %540 = vrot.lane.b32.xlu0 %v468, 4
      %v541 = vpop.permute.xlu0 %540
      %542 = vrot.lane.b32.xlu0 %v470, 4
      %v543 = vpop.permute.xlu0 %542
      %544 = vrot.lane.b32.xlu0 %v473, 4
      %v545 = vpop.permute.xlu0 %544
      %546 = vrot.lane.b32.xlu0 %v475, 4
      %v547 = vpop.permute.xlu0 %546
      %548 = vrot.lane.b32.xlu0 %v478, 4
      %v549 = vpop.permute.xlu0 %548
      %550 = vrot.lane.b32.xlu0 %v480, 4
      %v551 = vpop.permute.xlu0 %550
      %552 = vrot.lane.b32.xlu0 %v483, 4
      %v553 = vpop.permute.xlu0 %552
      %554 = vrot.lane.b32.xlu0 %v485, 4
      %v555 = vpop.permute.xlu0 %554
      %556 = vrot.lane.b32.xlu0 %v488, 4
      %v557 = vpop.permute.xlu0 %556
      %558 = vrot.lane.b32.xlu0 %v490, 4
      %v559 = vpop.permute.xlu0 %558
      %560 = vrot.lane.b32.xlu0 %v493, 4
      %v561 = vpop.permute.xlu0 %560
      %562 = vrot.lane.b32.xlu0 %v495, 4
      %v563 = vpop.permute.xlu0 %562
      %564 = vrot.lane.b32.xlu0 %v498, 4
      %v565 = vpop.permute.xlu0 %564
      %566 = vrot.lane.b32.xlu0 %v500, 4
      %v567 = vpop.permute.xlu0 %566
      %568 = vrot.lane.b32.xlu0 %v503, 4
      %v569 = vpop.permute.xlu0 %568
      %570 = vrot.lane.b32.xlu0 %v505, 4
      %v571 = vpop.permute.xlu0 %570
      %572 = vrot.lane.b32.xlu0 %v508, 4
      %v573 = vpop.permute.xlu0 %572
      %574 = vrot.lane.b32.xlu0 %v510, 4
      %v575 = vpop.permute.xlu0 %574
      %576 = vrot.lane.b32.xlu0 %v513, 4
      %v577 = vpop.permute.xlu0 %576
      %578 = vrot.lane.b32.xlu0 %v515, 4
      %v579 = vpop.permute.xlu0 %578
      %580 = vrot.lane.b32.xlu0 %v518, 4
      %v581 = vpop.permute.xlu0 %580
      %582 = vrot.lane.b32.xlu0 %v520, 4
      %v583 = vpop.permute.xlu0 %582
      %584 = vrot.lane.b32.xlu0 %v523, 4
      %v585 = vpop.permute.xlu0 %584
      %586 = vrot.lane.b32.xlu0 %v525, 4
      %v587 = vpop.permute.xlu0 %586
      %vm619 = vcmask 1045504
      %v620 = vrot.slane 0.0, 2
      %v621 = vsel %vm619, %v620, %v620
      %v622 = vrot.slane %v385, 2
      %v623 = vrot.slane %v292, 2
      %v624 = vsel %vm619, %v622, %v623
      %v625 = vrot.slane %v401, 2
      %v626 = vsel %vm619, %v623, %v625
      %v627 = vrot.slane %v386, 2
      %v628 = vrot.slane %v295, 2
      %v629 = vsel %vm619, %v627, %v628
      %v630 = vrot.slane %v402, 2
      %v631 = vsel %vm619, %v628, %v630
      %v632 = vrot.slane %v387, 2
      %v633 = vrot.slane %v298, 2
      %v634 = vsel %vm619, %v632, %v633
      %v635 = vrot.slane %v403, 2
      %v636 = vsel %vm619, %v633, %v635
      %v637 = vrot.slane %v388, 2
      %v638 = vrot.slane %v301, 2
      %v639 = vsel %vm619, %v637, %v638
      %v640 = vrot.slane %v404, 2
      %v641 = vsel %vm619, %v638, %v640
      %v642 = vrot.slane %v389, 2
      %v643 = vrot.slane %v304, 2
      %v644 = vsel %vm619, %v642, %v643
      %v645 = vrot.slane %v405, 2
      %v646 = vsel %vm619, %v643, %v645
      %v647 = vrot.slane %v390, 2
      %v648 = vrot.slane %v307, 2
      %v649 = vsel %vm619, %v647, %v648
      %v650 = vrot.slane %v406, 2
      %v651 = vsel %vm619, %v648, %v650
      %v652 = vrot.slane %v391, 2
      %v653 = vrot.slane %v310, 2
      %v654 = vsel %vm619, %v652, %v653
      %v655 = vrot.slane %v407, 2
      %v656 = vsel %vm619, %v653, %v655
      %v657 = vrot.slane %v392, 2
      %v658 = vrot.slane %v313, 2
      %v659 = vsel %vm619, %v657, %v658
      %v660 = vrot.slane %v408, 2
      %v661 = vsel %vm619, %v658, %v660
      %v662 = vrot.slane %v393, 2
      %v663 = vrot.slane %v316, 2
      %v664 = vsel %vm619, %v662, %v663
      %v665 = vrot.slane %v409, 2
      %v666 = vsel %vm619, %v663, %v665
      %v667 = vrot.slane %v394, 2
      %v668 = vrot.slane %v319, 2
      %v669 = vsel %vm619, %v667, %v668
      %v670 = vrot.slane %v410, 2
      %v671 = vsel %vm619, %v668, %v670
      %v672 = vrot.slane %v395, 2
      %v673 = vrot.slane %v322, 2
      %v674 = vsel %vm619, %v672, %v673
      %v675 = vrot.slane %v411, 2
      %v676 = vsel %vm619, %v673, %v675
      %v677 = vrot.slane %v396, 2
      %v678 = vrot.slane %v325, 2
      %v679 = vsel %vm619, %v677, %v678
      %v680 = vrot.slane %v412, 2
      %v681 = vsel %vm619, %v678, %v680
      %v682 = vrot.slane %v397, 2
      %v683 = vrot.slane %v328, 2
      %v684 = vsel %vm619, %v682, %v683
      %v685 = vrot.slane %v413, 2
      %v686 = vsel %vm619, %v683, %v685
      %v687 = vrot.slane %v398, 2
      %v688 = vrot.slane %v331, 2
      %v689 = vsel %vm619, %v687, %v688
      %v690 = vrot.slane %v414, 2
      %v691 = vsel %vm619, %v688, %v690
      %v692 = vrot.slane %v399, 2
      %v693 = vrot.slane %v334, 2
      %v694 = vsel %vm619, %v692, %v693
      %v695 = vrot.slane %v415, 2
      %v696 = vsel %vm619, %v693, %v695
      %697 = vrot.lane.b32.xlu0 %v621, 8
      %v698 = vpop.permute.xlu0 %697
      %699 = vrot.lane.b32.xlu0 %v624, 8
      %v700 = vpop.permute.xlu0 %699
      %701 = vrot.lane.b32.xlu0 %v626, 8
      %v702 = vpop.permute.xlu0 %701
      %703 = vrot.lane.b32.xlu0 %v629, 8
      %v704 = vpop.permute.xlu0 %703
      %705 = vrot.lane.b32.xlu0 %v631, 8
      %v706 = vpop.permute.xlu0 %705
      %707 = vrot.lane.b32.xlu0 %v634, 8
      %v708 = vpop.permute.xlu0 %707
      %709 = vrot.lane.b32.xlu0 %v636, 8
      %v710 = vpop.permute.xlu0 %709
      %711 = vrot.lane.b32.xlu0 %v639, 8
      %v712 = vpop.permute.xlu0 %711
      %713 = vrot.lane.b32.xlu0 %v641, 8
      %v714 = vpop.permute.xlu0 %713
      %715 = vrot.lane.b32.xlu0 %v644, 8
      %v716 = vpop.permute.xlu0 %715
      %717 = vrot.lane.b32.xlu0 %v646, 8
      %v718 = vpop.permute.xlu0 %717
      %719 = vrot.lane.b32.xlu0 %v649, 8
      %v720 = vpop.permute.xlu0 %719
      %721 = vrot.lane.b32.xlu0 %v651, 8
      %v722 = vpop.permute.xlu0 %721
      %723 = vrot.lane.b32.xlu0 %v654, 8
      %v724 = vpop.permute.xlu0 %723
      %725 = vrot.lane.b32.xlu0 %v656, 8
      %v726 = vpop.permute.xlu0 %725
      %727 = vrot.lane.b32.xlu0 %v659, 8
      %v728 = vpop.permute.xlu0 %727
      %729 = vrot.lane.b32.xlu0 %v661, 8
      %v730 = vpop.permute.xlu0 %729
      %731 = vrot.lane.b32.xlu0 %v664, 8
      %v732 = vpop.permute.xlu0 %731
      %733 = vrot.lane.b32.xlu0 %v666, 8
      %v734 = vpop.permute.xlu0 %733
      %735 = vrot.lane.b32.xlu0 %v669, 8
      %v736 = vpop.permute.xlu0 %735
      %737 = vrot.lane.b32.xlu0 %v671, 8
      %v738 = vpop.permute.xlu0 %737
      %739 = vrot.lane.b32.xlu0 %v674, 8
      %v740 = vpop.permute.xlu0 %739
      %741 = vrot.lane.b32.xlu0 %v676, 8
      %v742 = vpop.permute.xlu0 %741
      %743 = vrot.lane.b32.xlu0 %v679, 8
      %v744 = vpop.permute.xlu0 %743
      %745 = vrot.lane.b32.xlu0 %v681, 8
      %v746 = vpop.permute.xlu0 %745
      %747 = vrot.lane.b32.xlu0 %v684, 8
      %v748 = vpop.permute.xlu0 %747
      %749 = vrot.lane.b32.xlu0 %v686, 8
      %v750 = vpop.permute.xlu0 %749
      %751 = vrot.lane.b32.xlu0 %v689, 8
      %v752 = vpop.permute.xlu0 %751
      %753 = vrot.lane.b32.xlu0 %v691, 8
      %v754 = vpop.permute.xlu0 %753
      %755 = vrot.lane.b32.xlu0 %v694, 8
      %v756 = vpop.permute.xlu0 %755
      %757 = vrot.lane.b32.xlu0 %v696, 8
      %v758 = vpop.permute.xlu0 %757
      %791 = vrot.lane.b32.xlu0 %v385, 12
      %v792 = vpop.permute.xlu0 %791
      %793 = vrot.lane.b32.xlu0 %v292, 12
      %v794 = vpop.permute.xlu0 %793
      %795 = vrot.lane.b32.xlu0 %v386, 12
      %v796 = vpop.permute.xlu0 %795
      %797 = vrot.lane.b32.xlu0 %v295, 12
      %v798 = vpop.permute.xlu0 %797
      %799 = vrot.lane.b32.xlu0 %v387, 12
      %v800 = vpop.permute.xlu0 %799
      %801 = vrot.lane.b32.xlu0 %v298, 12
      %v802 = vpop.permute.xlu0 %801
      %803 = vrot.lane.b32.xlu0 %v388, 12
      %v804 = vpop.permute.xlu0 %803
      %805 = vrot.lane.b32.xlu0 %v301, 12
      %v806 = vpop.permute.xlu0 %805
      %807 = vrot.lane.b32.xlu0 %v389, 12
      %v808 = vpop.permute.xlu0 %807
      %809 = vrot.lane.b32.xlu0 %v304, 12
      %v810 = vpop.permute.xlu0 %809
      %811 = vrot.lane.b32.xlu0 %v390, 12
      %v812 = vpop.permute.xlu0 %811
      %813 = vrot.lane.b32.xlu0 %v307, 12
      %v814 = vpop.permute.xlu0 %813
      %815 = vrot.lane.b32.xlu0 %v391, 12
      %v816 = vpop.permute.xlu0 %815
      %817 = vrot.lane.b32.xlu0 %v310, 12
      %v818 = vpop.permute.xlu0 %817
      %819 = vrot.lane.b32.xlu0 %v392, 12
      %v820 = vpop.permute.xlu0 %819
      %821 = vrot.lane.b32.xlu0 %v313, 12
      %v822 = vpop.permute.xlu0 %821
      %823 = vrot.lane.b32.xlu0 %v393, 12
      %v824 = vpop.permute.xlu0 %823
      %825 = vrot.lane.b32.xlu0 %v316, 12
      %v826 = vpop.permute.xlu0 %825
      %827 = vrot.lane.b32.xlu0 %v394, 12
      %v828 = vpop.permute.xlu0 %827
      %829 = vrot.lane.b32.xlu0 %v319, 12
      %v830 = vpop.permute.xlu0 %829
      %831 = vrot.lane.b32.xlu0 %v395, 12
      %v832 = vpop.permute.xlu0 %831
      %833 = vrot.lane.b32.xlu0 %v322, 12
      %v834 = vpop.permute.xlu0 %833
      %835 = vrot.lane.b32.xlu0 %v396, 12
      %v836 = vpop.permute.xlu0 %835
      %837 = vrot.lane.b32.xlu0 %v325, 12
      %v838 = vpop.permute.xlu0 %837
      %839 = vrot.lane.b32.xlu0 %v397, 12
      %v840 = vpop.permute.xlu0 %839
      %841 = vrot.lane.b32.xlu0 %v328, 12
      %v842 = vpop.permute.xlu0 %841
      %843 = vrot.lane.b32.xlu0 %v398, 12
      %v844 = vpop.permute.xlu0 %843
      %845 = vrot.lane.b32.xlu0 %v331, 12
      %v846 = vpop.permute.xlu0 %845
      %847 = vrot.lane.b32.xlu0 %v399, 12
      %v848 = vpop.permute.xlu0 %847
      %849 = vrot.lane.b32.xlu0 %v334, 12
      %v850 = vpop.permute.xlu0 %849
      %851 = vrot.lane.b32.xlu0 %v400, 12
      %v852 = vpop.permute.xlu0 %851
      %853 = vrot.lane.b32.xlu0 %v337, 12
      %v854 = vpop.permute.xlu0 %853
      %v888 = vrot.slane %v400, 1
      %v889 = vrot.slane %v337, 1
      %v890 = vsel %vm448, %v888, %v889
      %v891 = vrot.slane %v416, 1
      %v892 = vsel %vm448, %v889, %v891
      %893 = vrot.lane.b32.xlu0 %v453, 16
      %v894 = vpop.permute.xlu0 %893
      %895 = vrot.lane.b32.xlu0 %v455, 16
      %v896 = vpop.permute.xlu0 %895
      %897 = vrot.lane.b32.xlu0 %v458, 16
      %v898 = vpop.permute.xlu0 %897
      %899 = vrot.lane.b32.xlu0 %v460, 16
      %v900 = vpop.permute.xlu0 %899
      %901 = vrot.lane.b32.xlu0 %v463, 16
      %v902 = vpop.permute.xlu0 %901
      %903 = vrot.lane.b32.xlu0 %v465, 16
      %v904 = vpop.permute.xlu0 %903
      %905 = vrot.lane.b32.xlu0 %v468, 16
      %v906 = vpop.permute.xlu0 %905
      %907 = vrot.lane.b32.xlu0 %v470, 16
      %v908 = vpop.permute.xlu0 %907
      %909 = vrot.lane.b32.xlu0 %v473, 16
      %v910 = vpop.permute.xlu0 %909
      %911 = vrot.lane.b32.xlu0 %v475, 16
      %v912 = vpop.permute.xlu0 %911
      %913 = vrot.lane.b32.xlu0 %v478, 16
      %v914 = vpop.permute.xlu0 %913
      %915 = vrot.lane.b32.xlu0 %v480, 16
      %v916 = vpop.permute.xlu0 %915
      %917 = vrot.lane.b32.xlu0 %v483, 16
      %v918 = vpop.permute.xlu0 %917
      %919 = vrot.lane.b32.xlu0 %v485, 16
      %v920 = vpop.permute.xlu0 %919
      %921 = vrot.lane.b32.xlu0 %v488, 16
      %v922 = vpop.permute.xlu0 %921
      %923 = vrot.lane.b32.xlu0 %v490, 16
      %v924 = vpop.permute.xlu0 %923
      %925 = vrot.lane.b32.xlu0 %v493, 16
      %v926 = vpop.permute.xlu0 %925
      %927 = vrot.lane.b32.xlu0 %v495, 16
      %v928 = vpop.permute.xlu0 %927
      %929 = vrot.lane.b32.xlu0 %v498, 16
      %v930 = vpop.permute.xlu0 %929
      %931 = vrot.lane.b32.xlu0 %v500, 16
      %v932 = vpop.permute.xlu0 %931
      %933 = vrot.lane.b32.xlu0 %v503, 16
      %v934 = vpop.permute.xlu0 %933
      %935 = vrot.lane.b32.xlu0 %v505, 16
      %v936 = vpop.permute.xlu0 %935
      %937 = vrot.lane.b32.xlu0 %v508, 16
      %v938 = vpop.permute.xlu0 %937
      %939 = vrot.lane.b32.xlu0 %v510, 16
      %v940 = vpop.permute.xlu0 %939
      %941 = vrot.lane.b32.xlu0 %v513, 16
      %v942 = vpop.permute.xlu0 %941
      %943 = vrot.lane.b32.xlu0 %v515, 16
      %v944 = vpop.permute.xlu0 %943
      %945 = vrot.lane.b32.xlu0 %v518, 16
      %v946 = vpop.permute.xlu0 %945
      %947 = vrot.lane.b32.xlu0 %v520, 16
      %v948 = vpop.permute.xlu0 %947
      %949 = vrot.lane.b32.xlu0 %v523, 16
      %v950 = vpop.permute.xlu0 %949
      %951 = vrot.lane.b32.xlu0 %v525, 16
      %v952 = vpop.permute.xlu0 %951
      %953 = vrot.lane.b32.xlu0 %v890, 16
      %v954 = vpop.permute.xlu0 %953
      %955 = vrot.lane.b32.xlu0 %v892, 16
      %v956 = vpop.permute.xlu0 %955
      %v989 = vrot.slane %v400, 2
      %v990 = vrot.slane %v337, 2
      %v991 = vsel %vm619, %v989, %v990
      %v992 = vrot.slane %v416, 2
      %v993 = vsel %vm619, %v990, %v992
      %994 = vrot.lane.b32.xlu0 %v624, 20
      %v995 = vpop.permute.xlu0 %994
      %996 = vrot.lane.b32.xlu0 %v626, 20
      %v997 = vpop.permute.xlu0 %996
      %998 = vrot.lane.b32.xlu0 %v629, 20
      %v999 = vpop.permute.xlu0 %998
      %1000 = vrot.lane.b32.xlu0 %v631, 20
      %v1001 = vpop.permute.xlu0 %1000
      %1002 = vrot.lane.b32.xlu0 %v634, 20
      %v1003 = vpop.permute.xlu0 %1002
      %1004 = vrot.lane.b32.xlu0 %v636, 20
      %v1005 = vpop.permute.xlu0 %1004
      %1006 = vrot.lane.b32.xlu0 %v639, 20
      %v1007 = vpop.permute.xlu0 %1006
      %1008 = vrot.lane.b32.xlu0 %v641, 20
      %v1009 = vpop.permute.xlu0 %1008
      %1010 = vrot.lane.b32.xlu0 %v644, 20
      %v1011 = vpop.permute.xlu0 %1010
      %1012 = vrot.lane.b32.xlu0 %v646, 20
      %v1013 = vpop.permute.xlu0 %1012
      %1014 = vrot.lane.b32.xlu0 %v649, 20
      %v1015 = vpop.permute.xlu0 %1014
      %1016 = vrot.lane.b32.xlu0 %v651, 20
      %v1017 = vpop.permute.xlu0 %1016
      %1018 = vrot.lane.b32.xlu0 %v654, 20
      %v1019 = vpop.permute.xlu0 %1018
      %1020 = vrot.lane.b32.xlu0 %v656, 20
      %v1021 = vpop.permute.xlu0 %1020
      %1022 = vrot.lane.b32.xlu0 %v659, 20
      %v1023 = vpop.permute.xlu0 %1022
      %1024 = vrot.lane.b32.xlu0 %v661, 20
      %v1025 = vpop.permute.xlu0 %1024
      %1026 = vrot.lane.b32.xlu0 %v664, 20
      %v1027 = vpop.permute.xlu0 %1026
      %1028 = vrot.lane.b32.xlu0 %v666, 20
      %v1029 = vpop.permute.xlu0 %1028
      %1030 = vrot.lane.b32.xlu0 %v669, 20
      %v1031 = vpop.permute.xlu0 %1030
      %1032 = vrot.lane.b32.xlu0 %v671, 20
      %v1033 = vpop.permute.xlu0 %1032
      %1034 = vrot.lane.b32.xlu0 %v674, 20
      %v1035 = vpop.permute.xlu0 %1034
      %1036 = vrot.lane.b32.xlu0 %v676, 20
      %v1037 = vpop.permute.xlu0 %1036
      %1038 = vrot.lane.b32.xlu0 %v679, 20
      %v1039 = vpop.permute.xlu0 %1038
      %1040 = vrot.lane.b32.xlu0 %v681, 20
      %v1041 = vpop.permute.xlu0 %1040
      %1042 = vrot.lane.b32.xlu0 %v684, 20
      %v1043 = vpop.permute.xlu0 %1042
      %1044 = vrot.lane.b32.xlu0 %v686, 20
      %v1045 = vpop.permute.xlu0 %1044
      %1046 = vrot.lane.b32.xlu0 %v689, 20
      %v1047 = vpop.permute.xlu0 %1046
      %1048 = vrot.lane.b32.xlu0 %v691, 20
      %v1049 = vpop.permute.xlu0 %1048
      %1050 = vrot.lane.b32.xlu0 %v694, 20
      %v1051 = vpop.permute.xlu0 %1050
      %1052 = vrot.lane.b32.xlu0 %v696, 20
      %v1053 = vpop.permute.xlu0 %1052
      %1054 = vrot.lane.b32.xlu0 %v991, 20
      %v1055 = vpop.permute.xlu0 %1054
      %1056 = vrot.lane.b32.xlu0 %v993, 20
      %v1057 = vpop.permute.xlu0 %1056
      %1090 = vrot.lane.b32.xlu0 %v386, 24
      %v1091 = vpop.permute.xlu0 %1090
      %1092 = vrot.lane.b32.xlu0 %v295, 24
      %v1093 = vpop.permute.xlu0 %1092
      %1094 = vrot.lane.b32.xlu0 %v387, 24
      %v1095 = vpop.permute.xlu0 %1094
      %1096 = vrot.lane.b32.xlu0 %v298, 24
      %v1097 = vpop.permute.xlu0 %1096
      %1098 = vrot.lane.b32.xlu0 %v388, 24
      %v1099 = vpop.permute.xlu0 %1098
      %1100 = vrot.lane.b32.xlu0 %v301, 24
      %v1101 = vpop.permute.xlu0 %1100
      %1102 = vrot.lane.b32.xlu0 %v389, 24
      %v1103 = vpop.permute.xlu0 %1102
      %1104 = vrot.lane.b32.xlu0 %v304, 24
      %v1105 = vpop.permute.xlu0 %1104
      %1106 = vrot.lane.b32.xlu0 %v390, 24
      %v1107 = vpop.permute.xlu0 %1106
      %1108 = vrot.lane.b32.xlu0 %v307, 24
      %v1109 = vpop.permute.xlu0 %1108
      %1110 = vrot.lane.b32.xlu0 %v391, 24
      %v1111 = vpop.permute.xlu0 %1110
      %1112 = vrot.lane.b32.xlu0 %v310, 24
      %v1113 = vpop.permute.xlu0 %1112
      %1114 = vrot.lane.b32.xlu0 %v392, 24
      %v1115 = vpop.permute.xlu0 %1114
      %1116 = vrot.lane.b32.xlu0 %v313, 24
      %v1117 = vpop.permute.xlu0 %1116
      %1118 = vrot.lane.b32.xlu0 %v393, 24
      %v1119 = vpop.permute.xlu0 %1118
      %1120 = vrot.lane.b32.xlu0 %v316, 24
      %v1121 = vpop.permute.xlu0 %1120
      %1122 = vrot.lane.b32.xlu0 %v394, 24
      %v1123 = vpop.permute.xlu0 %1122
      %1124 = vrot.lane.b32.xlu0 %v319, 24
      %v1125 = vpop.permute.xlu0 %1124
      %1126 = vrot.lane.b32.xlu0 %v395, 24
      %v1127 = vpop.permute.xlu0 %1126
      %1128 = vrot.lane.b32.xlu0 %v322, 24
      %v1129 = vpop.permute.xlu0 %1128
      %1130 = vrot.lane.b32.xlu0 %v396, 24
      %v1131 = vpop.permute.xlu0 %1130
      %1132 = vrot.lane.b32.xlu0 %v325, 24
      %v1133 = vpop.permute.xlu0 %1132
      %1134 = vrot.lane.b32.xlu0 %v397, 24
      %v1135 = vpop.permute.xlu0 %1134
      %1136 = vrot.lane.b32.xlu0 %v328, 24
      %v1137 = vpop.permute.xlu0 %1136
      %1138 = vrot.lane.b32.xlu0 %v398, 24
      %v1139 = vpop.permute.xlu0 %1138
      %1140 = vrot.lane.b32.xlu0 %v331, 24
      %v1141 = vpop.permute.xlu0 %1140
      %1142 = vrot.lane.b32.xlu0 %v399, 24
      %v1143 = vpop.permute.xlu0 %1142
      %1144 = vrot.lane.b32.xlu0 %v334, 24
      %v1145 = vpop.permute.xlu0 %1144
      %1146 = vrot.lane.b32.xlu0 %v400, 24
      %v1147 = vpop.permute.xlu0 %1146
      %1148 = vrot.lane.b32.xlu0 %v337, 24
      %v1149 = vpop.permute.xlu0 %1148
      %1150 = vrot.lane.b32.xlu0 0.0, 24
      %v1151 = vpop.permute.xlu0 %1150
      %1183 = vrot.lane.b32.xlu0 %v458, 28
      %v1184 = vpop.permute.xlu0 %1183
      %1185 = vrot.lane.b32.xlu0 %v460, 28
      %v1186 = vpop.permute.xlu0 %1185
      %1187 = vrot.lane.b32.xlu0 %v463, 28
      %v1188 = vpop.permute.xlu0 %1187
      %1189 = vrot.lane.b32.xlu0 %v465, 28
      %v1190 = vpop.permute.xlu0 %1189
      %1191 = vrot.lane.b32.xlu0 %v468, 28
      %v1192 = vpop.permute.xlu0 %1191
      %1193 = vrot.lane.b32.xlu0 %v470, 28
      %v1194 = vpop.permute.xlu0 %1193
      %1195 = vrot.lane.b32.xlu0 %v473, 28
      %v1196 = vpop.permute.xlu0 %1195
      %1197 = vrot.lane.b32.xlu0 %v475, 28
      %v1198 = vpop.permute.xlu0 %1197
      %1199 = vrot.lane.b32.xlu0 %v478, 28
      %v1200 = vpop.permute.xlu0 %1199
      %1201 = vrot.lane.b32.xlu0 %v480, 28
      %v1202 = vpop.permute.xlu0 %1201
      %1203 = vrot.lane.b32.xlu0 %v483, 28
      %v1204 = vpop.permute.xlu0 %1203
      %1205 = vrot.lane.b32.xlu0 %v485, 28
      %v1206 = vpop.permute.xlu0 %1205
      %1207 = vrot.lane.b32.xlu0 %v488, 28
      %v1208 = vpop.permute.xlu0 %1207
      %1209 = vrot.lane.b32.xlu0 %v490, 28
      %v1210 = vpop.permute.xlu0 %1209
      %1211 = vrot.lane.b32.xlu0 %v493, 28
      %v1212 = vpop.permute.xlu0 %1211
      %1213 = vrot.lane.b32.xlu0 %v495, 28
      %v1214 = vpop.permute.xlu0 %1213
      %1215 = vrot.lane.b32.xlu0 %v498, 28
      %v1216 = vpop.permute.xlu0 %1215
      %1217 = vrot.lane.b32.xlu0 %v500, 28
      %v1218 = vpop.permute.xlu0 %1217
      %1219 = vrot.lane.b32.xlu0 %v503, 28
      %v1220 = vpop.permute.xlu0 %1219
      %1221 = vrot.lane.b32.xlu0 %v505, 28
      %v1222 = vpop.permute.xlu0 %1221
      %1223 = vrot.lane.b32.xlu0 %v508, 28
      %v1224 = vpop.permute.xlu0 %1223
      %1225 = vrot.lane.b32.xlu0 %v510, 28
      %v1226 = vpop.permute.xlu0 %1225
      %1227 = vrot.lane.b32.xlu0 %v513, 28
      %v1228 = vpop.permute.xlu0 %1227
      %1229 = vrot.lane.b32.xlu0 %v515, 28
      %v1230 = vpop.permute.xlu0 %1229
      %1231 = vrot.lane.b32.xlu0 %v518, 28
      %v1232 = vpop.permute.xlu0 %1231
      %1233 = vrot.lane.b32.xlu0 %v520, 28
      %v1234 = vpop.permute.xlu0 %1233
      %1235 = vrot.lane.b32.xlu0 %v523, 28
      %v1236 = vpop.permute.xlu0 %1235
      %1237 = vrot.lane.b32.xlu0 %v525, 28
      %v1238 = vpop.permute.xlu0 %1237
      %1239 = vrot.lane.b32.xlu0 %v890, 28
      %v1240 = vpop.permute.xlu0 %1239
      %1241 = vrot.lane.b32.xlu0 %v892, 28
      %v1242 = vpop.permute.xlu0 %1241
      %1243 = vrot.lane.b32.xlu0 %v450, 28
      %v1244 = vpop.permute.xlu0 %1243
      %1276 = vrot.lane.b32.xlu0 %v629, 32
      %v1277 = vpop.permute.xlu0 %1276
      %1278 = vrot.lane.b32.xlu0 %v631, 32
      %v1279 = vpop.permute.xlu0 %1278
      %1280 = vrot.lane.b32.xlu0 %v634, 32
      %v1281 = vpop.permute.xlu0 %1280
      %1282 = vrot.lane.b32.xlu0 %v636, 32
      %v1283 = vpop.permute.xlu0 %1282
      %1284 = vrot.lane.b32.xlu0 %v639, 32
      %v1285 = vpop.permute.xlu0 %1284
      %1286 = vrot.lane.b32.xlu0 %v641, 32
      %v1287 = vpop.permute.xlu0 %1286
      %1288 = vrot.lane.b32.xlu0 %v644, 32
      %v1289 = vpop.permute.xlu0 %1288
      %1290 = vrot.lane.b32.xlu0 %v646, 32
      %v1291 = vpop.permute.xlu0 %1290
      %1292 = vrot.lane.b32.xlu0 %v649, 32
      %v1293 = vpop.permute.xlu0 %1292
      %1294 = vrot.lane.b32.xlu0 %v651, 32
      %v1295 = vpop.permute.xlu0 %1294
      %1296 = vrot.lane.b32.xlu0 %v654, 32
      %v1297 = vpop.permute.xlu0 %1296
      %1298 = vrot.lane.b32.xlu0 %v656, 32
      %v1299 = vpop.permute.xlu0 %1298
      %1300 = vrot.lane.b32.xlu0 %v659, 32
      %v1301 = vpop.permute.xlu0 %1300
      %1302 = vrot.lane.b32.xlu0 %v661, 32
      %v1303 = vpop.permute.xlu0 %1302
      %1304 = vrot.lane.b32.xlu0 %v664, 32
      %v1305 = vpop.permute.xlu0 %1304
      %1306 = vrot.lane.b32.xlu0 %v666, 32
      %v1307 = vpop.permute.xlu0 %1306
      %1308 = vrot.lane.b32.xlu0 %v669, 32
      %v1309 = vpop.permute.xlu0 %1308
      %1310 = vrot.lane.b32.xlu0 %v671, 32
      %v1311 = vpop.permute.xlu0 %1310
      %1312 = vrot.lane.b32.xlu0 %v674, 32
      %v1313 = vpop.permute.xlu0 %1312
      %1314 = vrot.lane.b32.xlu0 %v676, 32
      %v1315 = vpop.permute.xlu0 %1314
      %1316 = vrot.lane.b32.xlu0 %v679, 32
      %v1317 = vpop.permute.xlu0 %1316
      %1318 = vrot.lane.b32.xlu0 %v681, 32
      %v1319 = vpop.permute.xlu0 %1318
      %1320 = vrot.lane.b32.xlu0 %v684, 32
      %v1321 = vpop.permute.xlu0 %1320
      %1322 = vrot.lane.b32.xlu0 %v686, 32
      %v1323 = vpop.permute.xlu0 %1322
      %1324 = vrot.lane.b32.xlu0 %v689, 32
      %v1325 = vpop.permute.xlu0 %1324
      %1326 = vrot.lane.b32.xlu0 %v691, 32
      %v1327 = vpop.permute.xlu0 %1326
      %1328 = vrot.lane.b32.xlu0 %v694, 32
      %v1329 = vpop.permute.xlu0 %1328
      %1330 = vrot.lane.b32.xlu0 %v696, 32
      %v1331 = vpop.permute.xlu0 %1330
      %1332 = vrot.lane.b32.xlu0 %v991, 32
      %v1333 = vpop.permute.xlu0 %1332
      %1334 = vrot.lane.b32.xlu0 %v993, 32
      %v1335 = vpop.permute.xlu0 %1334
      %1336 = vrot.lane.b32.xlu0 %v621, 32
      %v1337 = vpop.permute.xlu0 %1336
      %vm1369 = vcmask 31744
      %v1370 = vsel %vm1369, 0.0, %v527
      %v1371 = vsel %vm1369, %v385, %v529
      %v1372 = vsel %vm1369, %v292, %v531
      %v1373 = vsel %vm1369, %v386, %v533
      %v1374 = vsel %vm1369, %v295, %v535
      %v1375 = vsel %vm1369, %v387, %v537
      %v1376 = vsel %vm1369, %v298, %v539
      %v1377 = vsel %vm1369, %v388, %v541
      %v1378 = vsel %vm1369, %v301, %v543
      %v1379 = vsel %vm1369, %v389, %v545
      %v1380 = vsel %vm1369, %v304, %v547
      %v1381 = vsel %vm1369, %v390, %v549
      %v1382 = vsel %vm1369, %v307, %v551
      %v1383 = vsel %vm1369, %v391, %v553
      %v1384 = vsel %vm1369, %v310, %v555
      %v1385 = vsel %vm1369, %v392, %v557
      %v1386 = vsel %vm1369, %v313, %v559
      %v1387 = vsel %vm1369, %v393, %v561
      %v1388 = vsel %vm1369, %v316, %v563
      %v1389 = vsel %vm1369, %v394, %v565
      %v1390 = vsel %vm1369, %v319, %v567
      %v1391 = vsel %vm1369, %v395, %v569
      %v1392 = vsel %vm1369, %v322, %v571
      %v1393 = vsel %vm1369, %v396, %v573
      %v1394 = vsel %vm1369, %v325, %v575
      %v1395 = vsel %vm1369, %v397, %v577
      %v1396 = vsel %vm1369, %v328, %v579
      %v1397 = vsel %vm1369, %v398, %v581
      %v1398 = vsel %vm1369, %v331, %v583
      %v1399 = vsel %vm1369, %v399, %v585
      %v1400 = vsel %vm1369, %v334, %v587
      %vm1401 = vcmask 64512
      %v1402 = vsel %vm1401, %v1370, %v698
      %v1403 = vsel %vm1401, %v1371, %v700
      %v1404 = vsel %vm1401, %v1372, %v702
      %v1405 = vsel %vm1401, %v1373, %v704
      %v1406 = vsel %vm1401, %v1374, %v706
      %v1407 = vsel %vm1401, %v1375, %v708
      %v1408 = vsel %vm1401, %v1376, %v710
      %v1409 = vsel %vm1401, %v1377, %v712
      %v1410 = vsel %vm1401, %v1378, %v714
      %v1411 = vsel %vm1401, %v1379, %v716
      %v1412 = vsel %vm1401, %v1380, %v718
      %v1413 = vsel %vm1401, %v1381, %v720
      %v1414 = vsel %vm1401, %v1382, %v722
      %v1415 = vsel %vm1401, %v1383, %v724
      %v1416 = vsel %vm1401, %v1384, %v726
      %v1417 = vsel %vm1401, %v1385, %v728
      %v1418 = vsel %vm1401, %v1386, %v730
      %v1419 = vsel %vm1401, %v1387, %v732
      %v1420 = vsel %vm1401, %v1388, %v734
      %v1421 = vsel %vm1401, %v1389, %v736
      %v1422 = vsel %vm1401, %v1390, %v738
      %v1423 = vsel %vm1401, %v1391, %v740
      %v1424 = vsel %vm1401, %v1392, %v742
      %v1425 = vsel %vm1401, %v1393, %v744
      %v1426 = vsel %vm1401, %v1394, %v746
      %v1427 = vsel %vm1401, %v1395, %v748
      %v1428 = vsel %vm1401, %v1396, %v750
      %v1429 = vsel %vm1401, %v1397, %v752
      %v1430 = vsel %vm1401, %v1398, %v754
      %v1431 = vsel %vm1401, %v1399, %v756
      %v1432 = vsel %vm1401, %v1400, %v758
      %vm1433 = vcmask 97280
      %v1434 = vsel %vm1433, %v1402, %v792
      %v1435 = vsel %vm1433, %v1402, %v794
      %v1436 = vsel %vm1433, %v1403, %v796
      %v1437 = vsel %vm1433, %v1404, %v798
      %v1438 = vsel %vm1433, %v1405, %v800
      %v1439 = vsel %vm1433, %v1406, %v802
      %v1440 = vsel %vm1433, %v1407, %v804
      %v1441 = vsel %vm1433, %v1408, %v806
      %v1442 = vsel %vm1433, %v1409, %v808
      %v1443 = vsel %vm1433, %v1410, %v810
      %v1444 = vsel %vm1433, %v1411, %v812
      %v1445 = vsel %vm1433, %v1412, %v814
      %v1446 = vsel %vm1433, %v1413, %v816
      %v1447 = vsel %vm1433, %v1414, %v818
      %v1448 = vsel %vm1433, %v1415, %v820
      %v1449 = vsel %vm1433, %v1416, %v822
      %v1450 = vsel %vm1433, %v1417, %v824
      %v1451 = vsel %vm1433, %v1418, %v826
      %v1452 = vsel %vm1433, %v1419, %v828
      %v1453 = vsel %vm1433, %v1420, %v830
      %v1454 = vsel %vm1433, %v1421, %v832
      %v1455 = vsel %vm1433, %v1422, %v834
      %v1456 = vsel %vm1433, %v1423, %v836
      %v1457 = vsel %vm1433, %v1424, %v838
      %v1458 = vsel %vm1433, %v1425, %v840
      %v1459 = vsel %vm1433, %v1426, %v842
      %v1460 = vsel %vm1433, %v1427, %v844
      %v1461 = vsel %vm1433, %v1428, %v846
      %v1462 = vsel %vm1433, %v1429, %v848
      %v1463 = vsel %vm1433, %v1430, %v850
      %v1464 = vsel %vm1433, %v1431, %v852
      %v1465 = vsel %vm1433, %v1432, %v854
      %vm1466 = vcmask 130048
      %v1467 = vsel %vm1466, %v1434, %v894
      %v1468 = vsel %vm1466, %v1435, %v896
      %v1469 = vsel %vm1466, %v1436, %v898
      %v1470 = vsel %vm1466, %v1437, %v900
      %v1471 = vsel %vm1466, %v1438, %v902
      %v1472 = vsel %vm1466, %v1439, %v904
      %v1473 = vsel %vm1466, %v1440, %v906
      %v1474 = vsel %vm1466, %v1441, %v908
      %v1475 = vsel %vm1466, %v1442, %v910
      %v1476 = vsel %vm1466, %v1443, %v912
      %v1477 = vsel %vm1466, %v1444, %v914
      %v1478 = vsel %vm1466, %v1445, %v916
      %v1479 = vsel %vm1466, %v1446, %v918
      %v1480 = vsel %vm1466, %v1447, %v920
      %v1481 = vsel %vm1466, %v1448, %v922
      %v1482 = vsel %vm1466, %v1449, %v924
      %v1483 = vsel %vm1466, %v1450, %v926
      %v1484 = vsel %vm1466, %v1451, %v928
      %v1485 = vsel %vm1466, %v1452, %v930
      %v1486 = vsel %vm1466, %v1453, %v932
      %v1487 = vsel %vm1466, %v1454, %v934
      %v1488 = vsel %vm1466, %v1455, %v936
      %v1489 = vsel %vm1466, %v1456, %v938
      %v1490 = vsel %vm1466, %v1457, %v940
      %v1491 = vsel %vm1466, %v1458, %v942
      %v1492 = vsel %vm1466, %v1459, %v944
      %v1493 = vsel %vm1466, %v1460, %v946
      %v1494 = vsel %vm1466, %v1461, %v948
      %v1495 = vsel %vm1466, %v1462, %v950
      %v1496 = vsel %vm1466, %v1463, %v952
      %v1497 = vsel %vm1466, %v1464, %v954
      %v1498 = vsel %vm1466, %v1465, %v956
      %vm1499 = vcmask 162816
      %v1500 = vsel %vm1499, %v1467, %v995
      %v1501 = vsel %vm1499, %v1468, %v997
      %v1502 = vsel %vm1499, %v1469, %v999
      %v1503 = vsel %vm1499, %v1470, %v1001
      %v1504 = vsel %vm1499, %v1471, %v1003
      %v1505 = vsel %vm1499, %v1472, %v1005
      %v1506 = vsel %vm1499, %v1473, %v1007
      %v1507 = vsel %vm1499, %v1474, %v1009
      %v1508 = vsel %vm1499, %v1475, %v1011
      %v1509 = vsel %vm1499, %v1476, %v1013
      %v1510 = vsel %vm1499, %v1477, %v1015
      %v1511 = vsel %vm1499, %v1478, %v1017
      %v1512 = vsel %vm1499, %v1479, %v1019
      %v1513 = vsel %vm1499, %v1480, %v1021
      %v1514 = vsel %vm1499, %v1481, %v1023
      %v1515 = vsel %vm1499, %v1482, %v1025
      %v1516 = vsel %vm1499, %v1483, %v1027
      %v1517 = vsel %vm1499, %v1484, %v1029
      %v1518 = vsel %vm1499, %v1485, %v1031
      %v1519 = vsel %vm1499, %v1486, %v1033
      %v1520 = vsel %vm1499, %v1487, %v1035
      %v1521 = vsel %vm1499, %v1488, %v1037
      %v1522 = vsel %vm1499, %v1489, %v1039
      %v1523 = vsel %vm1499, %v1490, %v1041
      %v1524 = vsel %vm1499, %v1491, %v1043
      %v1525 = vsel %vm1499, %v1492, %v1045
      %v1526 = vsel %vm1499, %v1493, %v1047
      %v1527 = vsel %vm1499, %v1494, %v1049
      %v1528 = vsel %vm1499, %v1495, %v1051
      %v1529 = vsel %vm1499, %v1496, %v1053
      %v1530 = vsel %vm1499, %v1497, %v1055
      %v1531 = vsel %vm1499, %v1498, %v1057
      %vm1532 = vcmask 195584
      %v1533 = vsel %vm1532, %v1500, %v1091
      %v1534 = vsel %vm1532, %v1501, %v1093
      %v1535 = vsel %vm1532, %v1502, %v1095
      %v1536 = vsel %vm1532, %v1503, %v1097
      %v1537 = vsel %vm1532, %v1504, %v1099
      %v1538 = vsel %vm1532, %v1505, %v1101
      %v1539 = vsel %vm1532, %v1506, %v1103
      %v1540 = vsel %vm1532, %v1507, %v1105
      %v1541 = vsel %vm1532, %v1508, %v1107
      %v1542 = vsel %vm1532, %v1509, %v1109
      %v1543 = vsel %vm1532, %v1510, %v1111
      %v1544 = vsel %vm1532, %v1511, %v1113
      %v1545 = vsel %vm1532, %v1512, %v1115
      %v1546 = vsel %vm1532, %v1513, %v1117
      %v1547 = vsel %vm1532, %v1514, %v1119
      %v1548 = vsel %vm1532, %v1515, %v1121
      %v1549 = vsel %vm1532, %v1516, %v1123
      %v1550 = vsel %vm1532, %v1517, %v1125
      %v1551 = vsel %vm1532, %v1518, %v1127
      %v1552 = vsel %vm1532, %v1519, %v1129
      %v1553 = vsel %vm1532, %v1520, %v1131
      %v1554 = vsel %vm1532, %v1521, %v1133
      %v1555 = vsel %vm1532, %v1522, %v1135
      %v1556 = vsel %vm1532, %v1523, %v1137
      %v1557 = vsel %vm1532, %v1524, %v1139
      %v1558 = vsel %vm1532, %v1525, %v1141
      %v1559 = vsel %vm1532, %v1526, %v1143
      %v1560 = vsel %vm1532, %v1527, %v1145
      %v1561 = vsel %vm1532, %v1528, %v1147
      %v1562 = vsel %vm1532, %v1529, %v1149
      %v1563 = vsel %vm1532, %v1530, %v1151
      %v1564 = vsel %vm1532, %v1531, %v1151
      %vm1565 = vcmask 228352
      %v1566 = vsel %vm1565, %v1533, %v1184
      %v1567 = vsel %vm1565, %v1534, %v1186
      %v1568 = vsel %vm1565, %v1535, %v1188
      %v1569 = vsel %vm1565, %v1536, %v1190
      %v1570 = vsel %vm1565, %v1537, %v1192
      %v1571 = vsel %vm1565, %v1538, %v1194
      %v1572 = vsel %vm1565, %v1539, %v1196
      %v1573 = vsel %vm1565, %v1540, %v1198
      %v1574 = vsel %vm1565, %v1541, %v1200
      %v1575 = vsel %vm1565, %v1542, %v1202
      %v1576 = vsel %vm1565, %v1543, %v1204
      %v1577 = vsel %vm1565, %v1544, %v1206
      %v1578 = vsel %vm1565, %v1545, %v1208
      %v1579 = vsel %vm1565, %v1546, %v1210
      %v1580 = vsel %vm1565, %v1547, %v1212
      %v1581 = vsel %vm1565, %v1548, %v1214
      %v1582 = vsel %vm1565, %v1549, %v1216
      %v1583 = vsel %vm1565, %v1550, %v1218
      %v1584 = vsel %vm1565, %v1551, %v1220
      %v1585 = vsel %vm1565, %v1552, %v1222
      %v1586 = vsel %vm1565, %v1553, %v1224
      %v1587 = vsel %vm1565, %v1554, %v1226
      %v1588 = vsel %vm1565, %v1555, %v1228
      %v1589 = vsel %vm1565, %v1556, %v1230
      %v1590 = vsel %vm1565, %v1557, %v1232
      %v1591 = vsel %vm1565, %v1558, %v1234
      %v1592 = vsel %vm1565, %v1559, %v1236
      %v1593 = vsel %vm1565, %v1560, %v1238
      %v1594 = vsel %vm1565, %v1561, %v1240
      %v1595 = vsel %vm1565, %v1562, %v1242
      %v1596 = vsel %vm1565, %v1563, %v1244
      %v1597 = vsel %vm1565, %v1564, %v1244
      %vm1598 = vcmask 261120
      %v1599 = vsel %vm1598, %v1566, %v1277
      %v1600 = vsel %vm1598, %v1567, %v1279
      %v1601 = vsel %vm1598, %v1568, %v1281
      %v1602 = vsel %vm1598, %v1569, %v1283
      %v1603 = vsel %vm1598, %v1570, %v1285
      %v1604 = vsel %vm1598, %v1571, %v1287
      %v1605 = vsel %vm1598, %v1572, %v1289
      %v1606 = vsel %vm1598, %v1573, %v1291
      %v1607 = vsel %vm1598, %v1574, %v1293
      %v1608 = vsel %vm1598, %v1575, %v1295
      %v1609 = vsel %vm1598, %v1576, %v1297
      %v1610 = vsel %vm1598, %v1577, %v1299
      %v1611 = vsel %vm1598, %v1578, %v1301
      %v1612 = vsel %vm1598, %v1579, %v1303
      %v1613 = vsel %vm1598, %v1580, %v1305
      %v1614 = vsel %vm1598, %v1581, %v1307
      %v1615 = vsel %vm1598, %v1582, %v1309
      %v1616 = vsel %vm1598, %v1583, %v1311
      %v1617 = vsel %vm1598, %v1584, %v1313
      %v1618 = vsel %vm1598, %v1585, %v1315
      %v1619 = vsel %vm1598, %v1586, %v1317
      %v1620 = vsel %vm1598, %v1587, %v1319
      %v1621 = vsel %vm1598, %v1588, %v1321
      %v1622 = vsel %vm1598, %v1589, %v1323
      %v1623 = vsel %vm1598, %v1590, %v1325
      %v1624 = vsel %vm1598, %v1591, %v1327
      %v1625 = vsel %vm1598, %v1592, %v1329
      %v1626 = vsel %vm1598, %v1593, %v1331
      %v1627 = vsel %vm1598, %v1594, %v1333
      %v1628 = vsel %vm1598, %v1595, %v1335
      %v1629 = vsel %vm1598, %v1596, %v1337
      %v1630 = vsel %vm1598, %v1597, %v1337
      %v1631 = vld [vmem:[%s1] sm:$0xff]
      %v1632 = vld [vmem:[%s1 + $0x8] sm:$0xff]
      %v1633 = vld [vmem:[%s1 + $0x10] sm:$0xff]
      %v1634 = vld [vmem:[%s1 + $0x18] sm:$0xff]
      %v1635 = vld [vmem:[%s1 + $0x20] sm:$0xf]
      %v1636 = vld [vmem:[%s2] sm:$0x1]
      %v1638 = vperm.slane %v1636, 0
      %vm1640 = vcmask 293888
      %v1642 = vsel %vm1640, %v1599, 0
      %v1645 = vsel %vm1640, %v1600, 0
      %v1648 = vsel %vm1640, %v1601, 0
      %v1651 = vsel %vm1640, %v1602, 0
      %v1654 = vsel %vm1640, %v1603, 0
      %v1657 = vsel %vm1640, %v1604, 0
      %v1660 = vsel %vm1640, %v1605, 0
      %v1663 = vsel %vm1640, %v1606, 0
      %v1666 = vsel %vm1640, %v1607, 0
      %v1669 = vsel %vm1640, %v1608, 0
      %v1672 = vsel %vm1640, %v1609, 0
      %v1675 = vsel %vm1640, %v1610, 0
      %v1678 = vsel %vm1640, %v1611, 0
      %v1681 = vsel %vm1640, %v1612, 0
      %v1684 = vsel %vm1640, %v1613, 0
      %v1687 = vsel %vm1640, %v1614, 0
      %v1690 = vsel %vm1640, %v1615, 0
      %v1693 = vsel %vm1640, %v1616, 0
      %v1696 = vsel %vm1640, %v1617, 0
      %v1699 = vsel %vm1640, %v1618, 0
      %v1702 = vsel %vm1640, %v1619, 0
      %v1705 = vsel %vm1640, %v1620, 0
      %v1708 = vsel %vm1640, %v1621, 0
      %v1711 = vsel %vm1640, %v1622, 0
      %v1714 = vsel %vm1640, %v1623, 0
      %v1717 = vsel %vm1640, %v1624, 0
      %v1720 = vsel %vm1640, %v1625, 0
      %v1723 = vsel %vm1640, %v1626, 0
      %v1726 = vsel %vm1640, %v1627, 0
      %v1729 = vsel %vm1640, %v1628, 0
      %v1732 = vsel %vm1640, %v1629, 0
      %v1735 = vsel %vm1640, %v1630, 0
      %vm1737 = vcmask 1043456
      %v1739 = vsel %vm1737, %v1635, 0
      %1741 = vmatpush.msra.mxu0 0.0
      %1742 = vmatpush.msra.mxu0 0.0
      %1743 = vmatpush.msra.mxu0 0.0
      %1744 = vmatpush.msra.mxu0 0.0
      %1745 = vmatpush.msra.mxu0 0.0
      %1746 = vmatpush.msra.mxu0 0.0
      %1747 = vmatpush.msra.mxu0 0.0
      %1748 = vmatpush.msra.mxu0 0.0
      %1749 = vmatpush.msra.mxu0 0.0
      %1750 = vmatpush.msra.mxu0 0.0
      %1751 = vmatpush.msra.mxu0 0.0
      %1752 = vmatpush.msra.mxu0 %v1739
      %1753 = vmatpush.msra.mxu0 %v1634
      %1754 = vmatpush.msra.mxu0 %v1633
      %1755 = vmatpush.msra.mxu0 %v1632
      %1756 = vmatpush.msra.mxu0 %v1631
      %1757 = vmatmul.f32.gmra.mxu0 %v1642
      %v1758 = vpop.f32.mrf.mxu0
      %v1759 = vadd.f32 %v1638, %v1758
      %1760 = vmatmul.f32.gmra.mxu0 %v1645
      %v1761 = vpop.f32.mrf.mxu0
      %v1762 = vadd.f32 %v1638, %v1761
      %1763 = vmatmul.f32.gmra.mxu0 %v1648
      %v1764 = vpop.f32.mrf.mxu0
      %v1765 = vadd.f32 %v1638, %v1764
      %1766 = vmatmul.f32.gmra.mxu0 %v1651
      %v1767 = vpop.f32.mrf.mxu0
      %v1768 = vadd.f32 %v1638, %v1767
      %1769 = vmatmul.f32.gmra.mxu0 %v1654
      %v1770 = vpop.f32.mrf.mxu0
      %v1771 = vadd.f32 %v1638, %v1770
      %1772 = vmatmul.f32.gmra.mxu0 %v1657
      %v1773 = vpop.f32.mrf.mxu0
      %v1774 = vadd.f32 %v1638, %v1773
      %1775 = vmatmul.f32.gmra.mxu0 %v1660
      %v1776 = vpop.f32.mrf.mxu0
      %v1777 = vadd.f32 %v1638, %v1776
      %1778 = vmatmul.f32.gmra.mxu0 %v1663
      %v1779 = vpop.f32.mrf.mxu0
      %v1780 = vadd.f32 %v1638, %v1779
      %1781 = vmatmul.f32.gmra.mxu0 %v1666
      %v1782 = vpop.f32.mrf.mxu0
      %v1783 = vadd.f32 %v1638, %v1782
      %1784 = vmatmul.f32.gmra.mxu0 %v1669
      %v1785 = vpop.f32.mrf.mxu0
      %v1786 = vadd.f32 %v1638, %v1785
      %1787 = vmatmul.f32.gmra.mxu0 %v1672
      %v1788 = vpop.f32.mrf.mxu0
      %v1789 = vadd.f32 %v1638, %v1788
      %1790 = vmatmul.f32.gmra.mxu0 %v1675
      %v1791 = vpop.f32.mrf.mxu0
      %v1792 = vadd.f32 %v1638, %v1791
      %1793 = vmatmul.f32.gmra.mxu0 %v1678
      %v1794 = vpop.f32.mrf.mxu0
      %v1795 = vadd.f32 %v1638, %v1794
      %1796 = vmatmul.f32.gmra.mxu0 %v1681
      %v1797 = vpop.f32.mrf.mxu0
      %v1798 = vadd.f32 %v1638, %v1797
      %1799 = vmatmul.f32.gmra.mxu0 %v1684
      %v1800 = vpop.f32.mrf.mxu0
      %v1801 = vadd.f32 %v1638, %v1800
      %1802 = vmatmul.f32.gmra.mxu0 %v1687
      %v1803 = vpop.f32.mrf.mxu0
      %v1804 = vadd.f32 %v1638, %v1803
      %1805 = vmatmul.f32.gmra.mxu0 %v1690
      %v1806 = vpop.f32.mrf.mxu0
      %v1807 = vadd.f32 %v1638, %v1806
      %1808 = vmatmul.f32.gmra.mxu0 %v1693
      %v1809 = vpop.f32.mrf.mxu0
      %v1810 = vadd.f32 %v1638, %v1809
      %1811 = vmatmul.f32.gmra.mxu0 %v1696
      %v1812 = vpop.f32.mrf.mxu0
      %v1813 = vadd.f32 %v1638, %v1812
      %1814 = vmatmul.f32.gmra.mxu0 %v1699
      %v1815 = vpop.f32.mrf.mxu0
      %v1816 = vadd.f32 %v1638, %v1815
      %1817 = vmatmul.f32.gmra.mxu0 %v1702
      %v1818 = vpop.f32.mrf.mxu0
      %v1819 = vadd.f32 %v1638, %v1818
      %1820 = vmatmul.f32.gmra.mxu0 %v1705
      %v1821 = vpop.f32.mrf.mxu0
      %v1822 = vadd.f32 %v1638, %v1821
      %1823 = vmatmul.f32.gmra.mxu0 %v1708
      %v1824 = vpop.f32.mrf.mxu0
      %v1825 = vadd.f32 %v1638, %v1824
      %1826 = vmatmul.f32.gmra.mxu0 %v1711
      %v1827 = vpop.f32.mrf.mxu0
      %v1828 = vadd.f32 %v1638, %v1827
      %1829 = vmatmul.f32.gmra.mxu0 %v1714
      %v1830 = vpop.f32.mrf.mxu0
      %v1831 = vadd.f32 %v1638, %v1830
      %1832 = vmatmul.f32.gmra.mxu0 %v1717
      %v1833 = vpop.f32.mrf.mxu0
      %v1834 = vadd.f32 %v1638, %v1833
      %1835 = vmatmul.f32.gmra.mxu0 %v1720
      %v1836 = vpop.f32.mrf.mxu0
      %v1837 = vadd.f32 %v1638, %v1836
      %1838 = vmatmul.f32.gmra.mxu0 %v1723
      %v1839 = vpop.f32.mrf.mxu0
      %v1840 = vadd.f32 %v1638, %v1839
      %1841 = vmatmul.f32.gmra.mxu0 %v1726
      %v1842 = vpop.f32.mrf.mxu0
      %v1843 = vadd.f32 %v1638, %v1842
      %1844 = vmatmul.f32.gmra.mxu0 %v1729
      %v1845 = vpop.f32.mrf.mxu0
      %v1846 = vadd.f32 %v1638, %v1845
      %1847 = vmatmul.f32.gmra.mxu0 %v1732
      %v1848 = vpop.f32.mrf.mxu0
      %v1849 = vadd.f32 %v1638, %v1848
      %1850 = vmatmul.f32.gmra.mxu0 %v1735
      %v1851 = vpop.f32.mrf.mxu0
      %v1852 = vadd.f32 %v1638, %v1851
      %1853 = vdwg.mxu0
      %v1854 = vmax.f32 %v1759, 0.0
      %v1855 = vmax.f32 %v1762, 0.0
      %v1856 = vmax.f32 %v1765, 0.0
      %v1857 = vmax.f32 %v1768, 0.0
      %v1858 = vmax.f32 %v1771, 0.0
      %v1859 = vmax.f32 %v1774, 0.0
      %v1860 = vmax.f32 %v1777, 0.0
      %v1861 = vmax.f32 %v1780, 0.0
      %v1862 = vmax.f32 %v1783, 0.0
      %v1863 = vmax.f32 %v1786, 0.0
      %v1864 = vmax.f32 %v1789, 0.0
      %v1865 = vmax.f32 %v1792, 0.0
      %v1866 = vmax.f32 %v1795, 0.0
      %v1867 = vmax.f32 %v1798, 0.0
      %v1868 = vmax.f32 %v1801, 0.0
      %v1869 = vmax.f32 %v1804, 0.0
      %v1870 = vmax.f32 %v1807, 0.0
      %v1871 = vmax.f32 %v1810, 0.0
      %v1872 = vmax.f32 %v1813, 0.0
      %v1873 = vmax.f32 %v1816, 0.0
      %v1874 = vmax.f32 %v1819, 0.0
      %v1875 = vmax.f32 %v1822, 0.0
      %v1876 = vmax.f32 %v1825, 0.0
      %v1877 = vmax.f32 %v1828, 0.0
      %v1878 = vmax.f32 %v1831, 0.0
      %v1879 = vmax.f32 %v1834, 0.0
      %v1880 = vmax.f32 %v1837, 0.0
      %v1881 = vmax.f32 %v1840, 0.0
      %v1882 = vmax.f32 %v1843, 0.0
      %v1883 = vmax.f32 %v1846, 0.0
      %v1884 = vmax.f32 %v1849, 0.0
      %v1885 = vmax.f32 %v1852, 0.0
      %v1918 = vrot.slane %v1854, 7
      %v1919 = vrot.slane %v1855, 7
      %v1920 = vsel %vm289, %v1918, %v1919
      %v1921 = vrot.slane %v1856, 7
      %v1922 = vrot.slane %v1857, 7
      %v1923 = vsel %vm289, %v1921, %v1922
      %v1924 = vrot.slane %v1858, 7
      %v1925 = vrot.slane %v1859, 7
      %v1926 = vsel %vm289, %v1924, %v1925
      %v1927 = vrot.slane %v1860, 7
      %v1928 = vrot.slane %v1861, 7
      %v1929 = vsel %vm289, %v1927, %v1928
      %v1930 = vrot.slane %v1862, 7
      %v1931 = vrot.slane %v1863, 7
      %v1932 = vsel %vm289, %v1930, %v1931
      %v1933 = vrot.slane %v1864, 7
      %v1934 = vrot.slane %v1865, 7
      %v1935 = vsel %vm289, %v1933, %v1934
      %v1936 = vrot.slane %v1866, 7
      %v1937 = vrot.slane %v1867, 7
      %v1938 = vsel %vm289, %v1936, %v1937
      %v1939 = vrot.slane %v1868, 7
      %v1940 = vrot.slane %v1869, 7
      %v1941 = vsel %vm289, %v1939, %v1940
      %v1942 = vrot.slane %v1870, 7
      %v1943 = vrot.slane %v1871, 7
      %v1944 = vsel %vm289, %v1942, %v1943
      %v1945 = vrot.slane %v1872, 7
      %v1946 = vrot.slane %v1873, 7
      %v1947 = vsel %vm289, %v1945, %v1946
      %v1948 = vrot.slane %v1874, 7
      %v1949 = vrot.slane %v1875, 7
      %v1950 = vsel %vm289, %v1948, %v1949
      %v1951 = vrot.slane %v1876, 7
      %v1952 = vrot.slane %v1877, 7
      %v1953 = vsel %vm289, %v1951, %v1952
      %v1954 = vrot.slane %v1878, 7
      %v1955 = vrot.slane %v1879, 7
      %v1956 = vsel %vm289, %v1954, %v1955
      %v1957 = vrot.slane %v1880, 7
      %v1958 = vrot.slane %v1881, 7
      %v1959 = vsel %vm289, %v1957, %v1958
      %v1960 = vrot.slane %v1882, 7
      %v1961 = vrot.slane %v1883, 7
      %v1962 = vsel %vm289, %v1960, %v1961
      %v1963 = vrot.slane %v1884, 7
      %v1964 = vrot.slane %v1885, 7
      %v1965 = vsel %vm289, %v1963, %v1964
      %v2013 = vsel %vm289, 0.0, %v1918
      %v2014 = vsel %vm289, 0.0, %v1921
      %v2015 = vsel %vm289, 0.0, %v1924
      %v2016 = vsel %vm289, 0.0, %v1927
      %v2017 = vsel %vm289, 0.0, %v1930
      %v2018 = vsel %vm289, 0.0, %v1933
      %v2019 = vsel %vm289, 0.0, %v1936
      %v2020 = vsel %vm289, 0.0, %v1939
      %v2021 = vsel %vm289, 0.0, %v1942
      %v2022 = vsel %vm289, 0.0, %v1945
      %v2023 = vsel %vm289, 0.0, %v1948
      %v2024 = vsel %vm289, 0.0, %v1951
      %v2025 = vsel %vm289, 0.0, %v1954
      %v2026 = vsel %vm289, 0.0, %v1957
      %v2027 = vsel %vm289, 0.0, %v1960
      %v2028 = vsel %vm289, 0.0, %v1963
      %v2029 = vsel %vm289, %v1919, 0.0
      %v2030 = vsel %vm289, %v1922, 0.0
      %v2031 = vsel %vm289, %v1925, 0.0
      %v2032 = vsel %vm289, %v1928, 0.0
      %v2033 = vsel %vm289, %v1931, 0.0
      %v2034 = vsel %vm289, %v1934, 0.0
      %v2035 = vsel %vm289, %v1937, 0.0
      %v2036 = vsel %vm289, %v1940, 0.0
      %v2037 = vsel %vm289, %v1943, 0.0
      %v2038 = vsel %vm289, %v1946, 0.0
      %v2039 = vsel %vm289, %v1949, 0.0
      %v2040 = vsel %vm289, %v1952, 0.0
      %v2041 = vsel %vm289, %v1955, 0.0
      %v2042 = vsel %vm289, %v1958, 0.0
      %v2043 = vsel %vm289, %v1961, 0.0
      %v2044 = vsel %vm289, %v1964, 0.0
      %v2075 = vrot.slane %v2013, 1
      %v2076 = vrot.slane %v1920, 1
      %v2077 = vsel %vm448, %v2075, %v2076
      %v2078 = vrot.slane %v2029, 1
      %v2079 = vsel %vm448, %v2076, %v2078
      %v2080 = vrot.slane %v2014, 1
      %v2081 = vrot.slane %v1923, 1
      %v2082 = vsel %vm448, %v2080, %v2081
      %v2083 = vrot.slane %v2030, 1
      %v2084 = vsel %vm448, %v2081, %v2083
      %v2085 = vrot.slane %v2015, 1
      %v2086 = vrot.slane %v1926, 1
      %v2087 = vsel %vm448, %v2085, %v2086
      %v2088 = vrot.slane %v2031, 1
      %v2089 = vsel %vm448, %v2086, %v2088
      %v2090 = vrot.slane %v2016, 1
      %v2091 = vrot.slane %v1929, 1
      %v2092 = vsel %vm448, %v2090, %v2091
      %v2093 = vrot.slane %v2032, 1
      %v2094 = vsel %vm448, %v2091, %v2093
      %v2095 = vrot.slane %v2017, 1
      %v2096 = vrot.slane %v1932, 1
      %v2097 = vsel %vm448, %v2095, %v2096
      %v2098 = vrot.slane %v2033, 1
      %v2099 = vsel %vm448, %v2096, %v2098
      %v2100 = vrot.slane %v2018, 1
      %v2101 = vrot.slane %v1935, 1
      %v2102 = vsel %vm448, %v2100, %v2101
      %v2103 = vrot.slane %v2034, 1
      %v2104 = vsel %vm448, %v2101, %v2103
      %v2105 = vrot.slane %v2019, 1
      %v2106 = vrot.slane %v1938, 1
      %v2107 = vsel %vm448, %v2105, %v2106
      %v2108 = vrot.slane %v2035, 1
      %v2109 = vsel %vm448, %v2106, %v2108
      %v2110 = vrot.slane %v2020, 1
      %v2111 = vrot.slane %v1941, 1
      %v2112 = vsel %vm448, %v2110, %v2111
      %v2113 = vrot.slane %v2036, 1
      %v2114 = vsel %vm448, %v2111, %v2113
      %v2115 = vrot.slane %v2021, 1
      %v2116 = vrot.slane %v1944, 1
      %v2117 = vsel %vm448, %v2115, %v2116
      %v2118 = vrot.slane %v2037, 1
      %v2119 = vsel %vm448, %v2116, %v2118
      %v2120 = vrot.slane %v2022, 1
      %v2121 = vrot.slane %v1947, 1
      %v2122 = vsel %vm448, %v2120, %v2121
      %v2123 = vrot.slane %v2038, 1
      %v2124 = vsel %vm448, %v2121, %v2123
      %v2125 = vrot.slane %v2023, 1
      %v2126 = vrot.slane %v1950, 1
      %v2127 = vsel %vm448, %v2125, %v2126
      %v2128 = vrot.slane %v2039, 1
      %v2129 = vsel %vm448, %v2126, %v2128
      %v2130 = vrot.slane %v2024, 1
      %v2131 = vrot.slane %v1953, 1
      %v2132 = vsel %vm448, %v2130, %v2131
      %v2133 = vrot.slane %v2040, 1
      %v2134 = vsel %vm448, %v2131, %v2133
      %v2135 = vrot.slane %v2025, 1
      %v2136 = vrot.slane %v1956, 1
      %v2137 = vsel %vm448, %v2135, %v2136
      %v2138 = vrot.slane %v2041, 1
      %v2139 = vsel %vm448, %v2136, %v2138
      %v2140 = vrot.slane %v2026, 1
      %v2141 = vrot.slane %v1959, 1
      %v2142 = vsel %vm448, %v2140, %v2141
      %v2143 = vrot.slane %v2042, 1
      %v2144 = vsel %vm448, %v2141, %v2143
      %v2145 = vrot.slane %v2027, 1
      %v2146 = vrot.slane %v1962, 1
      %v2147 = vsel %vm448, %v2145, %v2146
      %v2148 = vrot.slane %v2043, 1
      %v2149 = vsel %vm448, %v2146, %v2148
      %2150 = vrot.lane.b32.xlu0 %v450, 8
      %v2151 = vpop.permute.xlu0 %2150
      %2152 = vrot.lane.b32.xlu0 %v2077, 8
      %v2153 = vpop.permute.xlu0 %2152
      %2154 = vrot.lane.b32.xlu0 %v2079, 8
      %v2155 = vpop.permute.xlu0 %2154
      %2156 = vrot.lane.b32.xlu0 %v2082, 8
      %v2157 = vpop.permute.xlu0 %2156
      %2158 = vrot.lane.b32.xlu0 %v2084, 8
      %v2159 = vpop.permute.xlu0 %2158
      %2160 = vrot.lane.b32.xlu0 %v2087, 8
      %v2161 = vpop.permute.xlu0 %2160
      %2162 = vrot.lane.b32.xlu0 %v2089, 8
      %v2163 = vpop.permute.xlu0 %2162
      %2164 = vrot.lane.b32.xlu0 %v2092, 8
      %v2165 = vpop.permute.xlu0 %2164
      %2166 = vrot.lane.b32.xlu0 %v2094, 8
      %v2167 = vpop.permute.xlu0 %2166
      %2168 = vrot.lane.b32.xlu0 %v2097, 8
      %v2169 = vpop.permute.xlu0 %2168
      %2170 = vrot.lane.b32.xlu0 %v2099, 8
      %v2171 = vpop.permute.xlu0 %2170
      %2172 = vrot.lane.b32.xlu0 %v2102, 8
      %v2173 = vpop.permute.xlu0 %2172
      %2174 = vrot.lane.b32.xlu0 %v2104, 8
      %v2175 = vpop.permute.xlu0 %2174
      %2176 = vrot.lane.b32.xlu0 %v2107, 8
      %v2177 = vpop.permute.xlu0 %2176
      %2178 = vrot.lane.b32.xlu0 %v2109, 8
      %v2179 = vpop.permute.xlu0 %2178
      %2180 = vrot.lane.b32.xlu0 %v2112, 8
      %v2181 = vpop.permute.xlu0 %2180
      %2182 = vrot.lane.b32.xlu0 %v2114, 8
      %v2183 = vpop.permute.xlu0 %2182
      %2184 = vrot.lane.b32.xlu0 %v2117, 8
      %v2185 = vpop.permute.xlu0 %2184
      %2186 = vrot.lane.b32.xlu0 %v2119, 8
      %v2187 = vpop.permute.xlu0 %2186
      %2188 = vrot.lane.b32.xlu0 %v2122, 8
      %v2189 = vpop.permute.xlu0 %2188
      %2190 = vrot.lane.b32.xlu0 %v2124, 8
      %v2191 = vpop.permute.xlu0 %2190
      %2192 = vrot.lane.b32.xlu0 %v2127, 8
      %v2193 = vpop.permute.xlu0 %2192
      %2194 = vrot.lane.b32.xlu0 %v2129, 8
      %v2195 = vpop.permute.xlu0 %2194
      %2196 = vrot.lane.b32.xlu0 %v2132, 8
      %v2197 = vpop.permute.xlu0 %2196
      %2198 = vrot.lane.b32.xlu0 %v2134, 8
      %v2199 = vpop.permute.xlu0 %2198
      %2200 = vrot.lane.b32.xlu0 %v2137, 8
      %v2201 = vpop.permute.xlu0 %2200
      %2202 = vrot.lane.b32.xlu0 %v2139, 8
      %v2203 = vpop.permute.xlu0 %2202
      %2204 = vrot.lane.b32.xlu0 %v2142, 8
      %v2205 = vpop.permute.xlu0 %2204
      %2206 = vrot.lane.b32.xlu0 %v2144, 8
      %v2207 = vpop.permute.xlu0 %2206
      %2208 = vrot.lane.b32.xlu0 %v2147, 8
      %v2209 = vpop.permute.xlu0 %2208
      %2210 = vrot.lane.b32.xlu0 %v2149, 8
      %v2211 = vpop.permute.xlu0 %2210
      %v2243 = vrot.slane %v2013, 2
      %v2244 = vrot.slane %v1920, 2
      %v2245 = vsel %vm619, %v2243, %v2244
      %v2246 = vrot.slane %v2029, 2
      %v2247 = vsel %vm619, %v2244, %v2246
      %v2248 = vrot.slane %v2014, 2
      %v2249 = vrot.slane %v1923, 2
      %v2250 = vsel %vm619, %v2248, %v2249
      %v2251 = vrot.slane %v2030, 2
      %v2252 = vsel %vm619, %v2249, %v2251
      %v2253 = vrot.slane %v2015, 2
      %v2254 = vrot.slane %v1926, 2
      %v2255 = vsel %vm619, %v2253, %v2254
      %v2256 = vrot.slane %v2031, 2
      %v2257 = vsel %vm619, %v2254, %v2256
      %v2258 = vrot.slane %v2016, 2
      %v2259 = vrot.slane %v1929, 2
      %v2260 = vsel %vm619, %v2258, %v2259
      %v2261 = vrot.slane %v2032, 2
      %v2262 = vsel %vm619, %v2259, %v2261
      %v2263 = vrot.slane %v2017, 2
      %v2264 = vrot.slane %v1932, 2
      %v2265 = vsel %vm619, %v2263, %v2264
      %v2266 = vrot.slane %v2033, 2
      %v2267 = vsel %vm619, %v2264, %v2266
      %v2268 = vrot.slane %v2018, 2
      %v2269 = vrot.slane %v1935, 2
      %v2270 = vsel %vm619, %v2268, %v2269
      %v2271 = vrot.slane %v2034, 2
      %v2272 = vsel %vm619, %v2269, %v2271
      %v2273 = vrot.slane %v2019, 2
      %v2274 = vrot.slane %v1938, 2
      %v2275 = vsel %vm619, %v2273, %v2274
      %v2276 = vrot.slane %v2035, 2
      %v2277 = vsel %vm619, %v2274, %v2276
      %v2278 = vrot.slane %v2020, 2
      %v2279 = vrot.slane %v1941, 2
      %v2280 = vsel %vm619, %v2278, %v2279
      %v2281 = vrot.slane %v2036, 2
      %v2282 = vsel %vm619, %v2279, %v2281
      %v2283 = vrot.slane %v2021, 2
      %v2284 = vrot.slane %v1944, 2
      %v2285 = vsel %vm619, %v2283, %v2284
      %v2286 = vrot.slane %v2037, 2
      %v2287 = vsel %vm619, %v2284, %v2286
      %v2288 = vrot.slane %v2022, 2
      %v2289 = vrot.slane %v1947, 2
      %v2290 = vsel %vm619, %v2288, %v2289
      %v2291 = vrot.slane %v2038, 2
      %v2292 = vsel %vm619, %v2289, %v2291
      %v2293 = vrot.slane %v2023, 2
      %v2294 = vrot.slane %v1950, 2
      %v2295 = vsel %vm619, %v2293, %v2294
      %v2296 = vrot.slane %v2039, 2
      %v2297 = vsel %vm619, %v2294, %v2296
      %v2298 = vrot.slane %v2024, 2
      %v2299 = vrot.slane %v1953, 2
      %v2300 = vsel %vm619, %v2298, %v2299
      %v2301 = vrot.slane %v2040, 2
      %v2302 = vsel %vm619, %v2299, %v2301
      %v2303 = vrot.slane %v2025, 2
      %v2304 = vrot.slane %v1956, 2
      %v2305 = vsel %vm619, %v2303, %v2304
      %v2306 = vrot.slane %v2041, 2
      %v2307 = vsel %vm619, %v2304, %v2306
      %v2308 = vrot.slane %v2026, 2
      %v2309 = vrot.slane %v1959, 2
      %v2310 = vsel %vm619, %v2308, %v2309
      %v2311 = vrot.slane %v2042, 2
      %v2312 = vsel %vm619, %v2309, %v2311
      %v2313 = vrot.slane %v2027, 2
      %v2314 = vrot.slane %v1962, 2
      %v2315 = vsel %vm619, %v2313, %v2314
      %v2316 = vrot.slane %v2043, 2
      %v2317 = vsel %vm619, %v2314, %v2316
      %2318 = vrot.lane.b32.xlu0 %v621, 16
      %v2319 = vpop.permute.xlu0 %2318
      %2320 = vrot.lane.b32.xlu0 %v2245, 16
      %v2321 = vpop.permute.xlu0 %2320
      %2322 = vrot.lane.b32.xlu0 %v2247, 16
      %v2323 = vpop.permute.xlu0 %2322
      %2324 = vrot.lane.b32.xlu0 %v2250, 16
      %v2325 = vpop.permute.xlu0 %2324
      %2326 = vrot.lane.b32.xlu0 %v2252, 16
      %v2327 = vpop.permute.xlu0 %2326
      %2328 = vrot.lane.b32.xlu0 %v2255, 16
      %v2329 = vpop.permute.xlu0 %2328
      %2330 = vrot.lane.b32.xlu0 %v2257, 16
      %v2331 = vpop.permute.xlu0 %2330
      %2332 = vrot.lane.b32.xlu0 %v2260, 16
      %v2333 = vpop.permute.xlu0 %2332
      %2334 = vrot.lane.b32.xlu0 %v2262, 16
      %v2335 = vpop.permute.xlu0 %2334
      %2336 = vrot.lane.b32.xlu0 %v2265, 16
      %v2337 = vpop.permute.xlu0 %2336
      %2338 = vrot.lane.b32.xlu0 %v2267, 16
      %v2339 = vpop.permute.xlu0 %2338
      %2340 = vrot.lane.b32.xlu0 %v2270, 16
      %v2341 = vpop.permute.xlu0 %2340
      %2342 = vrot.lane.b32.xlu0 %v2272, 16
      %v2343 = vpop.permute.xlu0 %2342
      %2344 = vrot.lane.b32.xlu0 %v2275, 16
      %v2345 = vpop.permute.xlu0 %2344
      %2346 = vrot.lane.b32.xlu0 %v2277, 16
      %v2347 = vpop.permute.xlu0 %2346
      %2348 = vrot.lane.b32.xlu0 %v2280, 16
      %v2349 = vpop.permute.xlu0 %2348
      %2350 = vrot.lane.b32.xlu0 %v2282, 16
      %v2351 = vpop.permute.xlu0 %2350
      %2352 = vrot.lane.b32.xlu0 %v2285, 16
      %v2353 = vpop.permute.xlu0 %2352
      %2354 = vrot.lane.b32.xlu0 %v2287, 16
      %v2355 = vpop.permute.xlu0 %2354
      %2356 = vrot.lane.b32.xlu0 %v2290, 16
      %v2357 = vpop.permute.xlu0 %2356
      %2358 = vrot.lane.b32.xlu0 %v2292, 16
      %v2359 = vpop.permute.xlu0 %2358
      %2360 = vrot.lane.b32.xlu0 %v2295, 16
      %v2361 = vpop.permute.xlu0 %2360
      %2362 = vrot.lane.b32.xlu0 %v2297, 16
      %v2363 = vpop.permute.xlu0 %2362
      %2364 = vrot.lane.b32.xlu0 %v2300, 16
      %v2365 = vpop.permute.xlu0 %2364
      %2366 = vrot.lane.b32.xlu0 %v2302, 16
      %v2367 = vpop.permute.xlu0 %2366
      %2368 = vrot.lane.b32.xlu0 %v2305, 16
      %v2369 = vpop.permute.xlu0 %2368
      %2370 = vrot.lane.b32.xlu0 %v2307, 16
      %v2371 = vpop.permute.xlu0 %2370
      %2372 = vrot.lane.b32.xlu0 %v2310, 16
      %v2373 = vpop.permute.xlu0 %2372
      %2374 = vrot.lane.b32.xlu0 %v2312, 16
      %v2375 = vpop.permute.xlu0 %2374
      %2376 = vrot.lane.b32.xlu0 %v2315, 16
      %v2377 = vpop.permute.xlu0 %2376
      %2378 = vrot.lane.b32.xlu0 %v2317, 16
      %v2379 = vpop.permute.xlu0 %2378
      %2412 = vrot.lane.b32.xlu0 %v2013, 24
      %v2413 = vpop.permute.xlu0 %2412
      %2414 = vrot.lane.b32.xlu0 %v1920, 24
      %v2415 = vpop.permute.xlu0 %2414
      %2416 = vrot.lane.b32.xlu0 %v2014, 24
      %v2417 = vpop.permute.xlu0 %2416
      %2418 = vrot.lane.b32.xlu0 %v1923, 24
      %v2419 = vpop.permute.xlu0 %2418
      %2420 = vrot.lane.b32.xlu0 %v2015, 24
      %v2421 = vpop.permute.xlu0 %2420
      %2422 = vrot.lane.b32.xlu0 %v1926, 24
      %v2423 = vpop.permute.xlu0 %2422
      %2424 = vrot.lane.b32.xlu0 %v2016, 24
      %v2425 = vpop.permute.xlu0 %2424
      %2426 = vrot.lane.b32.xlu0 %v1929, 24
      %v2427 = vpop.permute.xlu0 %2426
      %2428 = vrot.lane.b32.xlu0 %v2017, 24
      %v2429 = vpop.permute.xlu0 %2428
      %2430 = vrot.lane.b32.xlu0 %v1932, 24
      %v2431 = vpop.permute.xlu0 %2430
      %2432 = vrot.lane.b32.xlu0 %v2018, 24
      %v2433 = vpop.permute.xlu0 %2432
      %2434 = vrot.lane.b32.xlu0 %v1935, 24
      %v2435 = vpop.permute.xlu0 %2434
      %2436 = vrot.lane.b32.xlu0 %v2019, 24
      %v2437 = vpop.permute.xlu0 %2436
      %2438 = vrot.lane.b32.xlu0 %v1938, 24
      %v2439 = vpop.permute.xlu0 %2438
      %2440 = vrot.lane.b32.xlu0 %v2020, 24
      %v2441 = vpop.permute.xlu0 %2440
      %2442 = vrot.lane.b32.xlu0 %v1941, 24
      %v2443 = vpop.permute.xlu0 %2442
      %2444 = vrot.lane.b32.xlu0 %v2021, 24
      %v2445 = vpop.permute.xlu0 %2444
      %2446 = vrot.lane.b32.xlu0 %v1944, 24
      %v2447 = vpop.permute.xlu0 %2446
      %2448 = vrot.lane.b32.xlu0 %v2022, 24
      %v2449 = vpop.permute.xlu0 %2448
      %2450 = vrot.lane.b32.xlu0 %v1947, 24
      %v2451 = vpop.permute.xlu0 %2450
      %2452 = vrot.lane.b32.xlu0 %v2023, 24
      %v2453 = vpop.permute.xlu0 %2452
      %2454 = vrot.lane.b32.xlu0 %v1950, 24
      %v2455 = vpop.permute.xlu0 %2454
      %2456 = vrot.lane.b32.xlu0 %v2024, 24
      %v2457 = vpop.permute.xlu0 %2456
      %2458 = vrot.lane.b32.xlu0 %v1953, 24
      %v2459 = vpop.permute.xlu0 %2458
      %2460 = vrot.lane.b32.xlu0 %v2025, 24
      %v2461 = vpop.permute.xlu0 %2460
      %2462 = vrot.lane.b32.xlu0 %v1956, 24
      %v2463 = vpop.permute.xlu0 %2462
      %2464 = vrot.lane.b32.xlu0 %v2026, 24
      %v2465 = vpop.permute.xlu0 %2464
      %2466 = vrot.lane.b32.xlu0 %v1959, 24
      %v2467 = vpop.permute.xlu0 %2466
      %2468 = vrot.lane.b32.xlu0 %v2027, 24
      %v2469 = vpop.permute.xlu0 %2468
      %2470 = vrot.lane.b32.xlu0 %v1962, 24
      %v2471 = vpop.permute.xlu0 %2470
      %2472 = vrot.lane.b32.xlu0 %v2028, 24
      %v2473 = vpop.permute.xlu0 %2472
      %2474 = vrot.lane.b32.xlu0 %v1965, 24
      %v2475 = vpop.permute.xlu0 %2474
      %v2509 = vrot.slane %v2028, 1
      %v2510 = vrot.slane %v1965, 1
      %v2511 = vsel %vm448, %v2509, %v2510
      %v2512 = vrot.slane %v2044, 1
      %v2513 = vsel %vm448, %v2510, %v2512
      %2514 = vrot.lane.b32.xlu0 %v2077, 32
      %v2515 = vpop.permute.xlu0 %2514
      %2516 = vrot.lane.b32.xlu0 %v2079, 32
      %v2517 = vpop.permute.xlu0 %2516
      %2518 = vrot.lane.b32.xlu0 %v2082, 32
      %v2519 = vpop.permute.xlu0 %2518
      %2520 = vrot.lane.b32.xlu0 %v2084, 32
      %v2521 = vpop.permute.xlu0 %2520
      %2522 = vrot.lane.b32.xlu0 %v2087, 32
      %v2523 = vpop.permute.xlu0 %2522
      %2524 = vrot.lane.b32.xlu0 %v2089, 32
      %v2525 = vpop.permute.xlu0 %2524
      %2526 = vrot.lane.b32.xlu0 %v2092, 32
      %v2527 = vpop.permute.xlu0 %2526
      %2528 = vrot.lane.b32.xlu0 %v2094, 32
      %v2529 = vpop.permute.xlu0 %2528
      %2530 = vrot.lane.b32.xlu0 %v2097, 32
      %v2531 = vpop.permute.xlu0 %2530
      %2532 = vrot.lane.b32.xlu0 %v2099, 32
      %v2533 = vpop.permute.xlu0 %2532
      %2534 = vrot.lane.b32.xlu0 %v2102, 32
      %v2535 = vpop.permute.xlu0 %2534
      %2536 = vrot.lane.b32.xlu0 %v2104, 32
      %v2537 = vpop.permute.xlu0 %2536
      %2538 = vrot.lane.b32.xlu0 %v2107, 32
      %v2539 = vpop.permute.xlu0 %2538
      %2540 = vrot.lane.b32.xlu0 %v2109, 32
      %v2541 = vpop.permute.xlu0 %2540
      %2542 = vrot.lane.b32.xlu0 %v2112, 32
      %v2543 = vpop.permute.xlu0 %2542
      %2544 = vrot.lane.b32.xlu0 %v2114, 32
      %v2545 = vpop.permute.xlu0 %2544
      %2546 = vrot.lane.b32.xlu0 %v2117, 32
      %v2547 = vpop.permute.xlu0 %2546
      %2548 = vrot.lane.b32.xlu0 %v2119, 32
      %v2549 = vpop.permute.xlu0 %2548
      %2550 = vrot.lane.b32.xlu0 %v2122, 32
      %v2551 = vpop.permute.xlu0 %2550
      %2552 = vrot.lane.b32.xlu0 %v2124, 32
      %v2553 = vpop.permute.xlu0 %2552
      %2554 = vrot.lane.b32.xlu0 %v2127, 32
      %v2555 = vpop.permute.xlu0 %2554
      %2556 = vrot.lane.b32.xlu0 %v2129, 32
      %v2557 = vpop.permute.xlu0 %2556
      %2558 = vrot.lane.b32.xlu0 %v2132, 32
      %v2559 = vpop.permute.xlu0 %2558
      %2560 = vrot.lane.b32.xlu0 %v2134, 32
      %v2561 = vpop.permute.xlu0 %2560
      %2562 = vrot.lane.b32.xlu0 %v2137, 32
      %v2563 = vpop.permute.xlu0 %2562
      %2564 = vrot.lane.b32.xlu0 %v2139, 32
      %v2565 = vpop.permute.xlu0 %2564
      %2566 = vrot.lane.b32.xlu0 %v2142, 32
      %v2567 = vpop.permute.xlu0 %2566
      %2568 = vrot.lane.b32.xlu0 %v2144, 32
      %v2569 = vpop.permute.xlu0 %2568
      %2570 = vrot.lane.b32.xlu0 %v2147, 32
      %v2571 = vpop.permute.xlu0 %2570
      %2572 = vrot.lane.b32.xlu0 %v2149, 32
      %v2573 = vpop.permute.xlu0 %2572
      %2574 = vrot.lane.b32.xlu0 %v2511, 32
      %v2575 = vpop.permute.xlu0 %2574
      %2576 = vrot.lane.b32.xlu0 %v2513, 32
      %v2577 = vpop.permute.xlu0 %2576
      %v2610 = vrot.slane %v2028, 2
      %v2611 = vrot.slane %v1965, 2
      %v2612 = vsel %vm619, %v2610, %v2611
      %v2613 = vrot.slane %v2044, 2
      %v2614 = vsel %vm619, %v2611, %v2613
      %2615 = vrot.lane.b32.xlu0 %v2245, 40
      %v2616 = vpop.permute.xlu0 %2615
      %2617 = vrot.lane.b32.xlu0 %v2247, 40
      %v2618 = vpop.permute.xlu0 %2617
      %2619 = vrot.lane.b32.xlu0 %v2250, 40
      %v2620 = vpop.permute.xlu0 %2619
      %2621 = vrot.lane.b32.xlu0 %v2252, 40
      %v2622 = vpop.permute.xlu0 %2621
      %2623 = vrot.lane.b32.xlu0 %v2255, 40
      %v2624 = vpop.permute.xlu0 %2623
      %2625 = vrot.lane.b32.xlu0 %v2257, 40
      %v2626 = vpop.permute.xlu0 %2625
      %2627 = vrot.lane.b32.xlu0 %v2260, 40
      %v2628 = vpop.permute.xlu0 %2627
      %2629 = vrot.lane.b32.xlu0 %v2262, 40
      %v2630 = vpop.permute.xlu0 %2629
      %2631 = vrot.lane.b32.xlu0 %v2265, 40
      %v2632 = vpop.permute.xlu0 %2631
      %2633 = vrot.lane.b32.xlu0 %v2267, 40
      %v2634 = vpop.permute.xlu0 %2633
      %2635 = vrot.lane.b32.xlu0 %v2270, 40
      %v2636 = vpop.permute.xlu0 %2635
      %2637 = vrot.lane.b32.xlu0 %v2272, 40
      %v2638 = vpop.permute.xlu0 %2637
      %2639 = vrot.lane.b32.xlu0 %v2275, 40
      %v2640 = vpop.permute.xlu0 %2639
      %2641 = vrot.lane.b32.xlu0 %v2277, 40
      %v2642 = vpop.permute.xlu0 %2641
      %2643 = vrot.lane.b32.xlu0 %v2280, 40
      %v2644 = vpop.permute.xlu0 %2643
      %2645 = vrot.lane.b32.xlu0 %v2282, 40
      %v2646 = vpop.permute.xlu0 %2645
      %2647 = vrot.lane.b32.xlu0 %v2285, 40
      %v2648 = vpop.permute.xlu0 %2647
      %2649 = vrot.lane.b32.xlu0 %v2287, 40
      %v2650 = vpop.permute.xlu0 %2649
      %2651 = vrot.lane.b32.xlu0 %v2290, 40
      %v2652 = vpop.permute.xlu0 %2651
      %2653 = vrot.lane.b32.xlu0 %v2292, 40
      %v2654 = vpop.permute.xlu0 %2653
      %2655 = vrot.lane.b32.xlu0 %v2295, 40
      %v2656 = vpop.permute.xlu0 %2655
      %2657 = vrot.lane.b32.xlu0 %v2297, 40
      %v2658 = vpop.permute.xlu0 %2657
      %2659 = vrot.lane.b32.xlu0 %v2300, 40
      %v2660 = vpop.permute.xlu0 %2659
      %2661 = vrot.lane.b32.xlu0 %v2302, 40
      %v2662 = vpop.permute.xlu0 %2661
      %2663 = vrot.lane.b32.xlu0 %v2305, 40
      %v2664 = vpop.permute.xlu0 %2663
      %2665 = vrot.lane.b32.xlu0 %v2307, 40
      %v2666 = vpop.permute.xlu0 %2665
      %2667 = vrot.lane.b32.xlu0 %v2310, 40
      %v2668 = vpop.permute.xlu0 %2667
      %2669 = vrot.lane.b32.xlu0 %v2312, 40
      %v2670 = vpop.permute.xlu0 %2669
      %2671 = vrot.lane.b32.xlu0 %v2315, 40
      %v2672 = vpop.permute.xlu0 %2671
      %2673 = vrot.lane.b32.xlu0 %v2317, 40
      %v2674 = vpop.permute.xlu0 %2673
      %2675 = vrot.lane.b32.xlu0 %v2612, 40
      %v2676 = vpop.permute.xlu0 %2675
      %2677 = vrot.lane.b32.xlu0 %v2614, 40
      %v2678 = vpop.permute.xlu0 %2677
      %2711 = vrot.lane.b32.xlu0 %v2014, 48
      %v2712 = vpop.permute.xlu0 %2711
      %2713 = vrot.lane.b32.xlu0 %v1923, 48
      %v2714 = vpop.permute.xlu0 %2713
      %2715 = vrot.lane.b32.xlu0 %v2015, 48
      %v2716 = vpop.permute.xlu0 %2715
      %2717 = vrot.lane.b32.xlu0 %v1926, 48
      %v2718 = vpop.permute.xlu0 %2717
      %2719 = vrot.lane.b32.xlu0 %v2016, 48
      %v2720 = vpop.permute.xlu0 %2719
      %2721 = vrot.lane.b32.xlu0 %v1929, 48
      %v2722 = vpop.permute.xlu0 %2721
      %2723 = vrot.lane.b32.xlu0 %v2017, 48
      %v2724 = vpop.permute.xlu0 %2723
      %2725 = vrot.lane.b32.xlu0 %v1932, 48
      %v2726 = vpop.permute.xlu0 %2725
      %2727 = vrot.lane.b32.xlu0 %v2018, 48
      %v2728 = vpop.permute.xlu0 %2727
      %2729 = vrot.lane.b32.xlu0 %v1935, 48
      %v2730 = vpop.permute.xlu0 %2729
      %2731 = vrot.lane.b32.xlu0 %v2019, 48
      %v2732 = vpop.permute.xlu0 %2731
      %2733 = vrot.lane.b32.xlu0 %v1938, 48
      %v2734 = vpop.permute.xlu0 %2733
      %2735 = vrot.lane.b32.xlu0 %v2020, 48
      %v2736 = vpop.permute.xlu0 %2735
      %2737 = vrot.lane.b32.xlu0 %v1941, 48
      %v2738 = vpop.permute.xlu0 %2737
      %2739 = vrot.lane.b32.xlu0 %v2021, 48
      %v2740 = vpop.permute.xlu0 %2739
      %2741 = vrot.lane.b32.xlu0 %v1944, 48
      %v2742 = vpop.permute.xlu0 %2741
      %2743 = vrot.lane.b32.xlu0 %v2022, 48
      %v2744 = vpop.permute.xlu0 %2743
      %2745 = vrot.lane.b32.xlu0 %v1947, 48
      %v2746 = vpop.permute.xlu0 %2745
      %2747 = vrot.lane.b32.xlu0 %v2023, 48
      %v2748 = vpop.permute.xlu0 %2747
      %2749 = vrot.lane.b32.xlu0 %v1950, 48
      %v2750 = vpop.permute.xlu0 %2749
      %2751 = vrot.lane.b32.xlu0 %v2024, 48
      %v2752 = vpop.permute.xlu0 %2751
      %2753 = vrot.lane.b32.xlu0 %v1953, 48
      %v2754 = vpop.permute.xlu0 %2753
      %2755 = vrot.lane.b32.xlu0 %v2025, 48
      %v2756 = vpop.permute.xlu0 %2755
      %2757 = vrot.lane.b32.xlu0 %v1956, 48
      %v2758 = vpop.permute.xlu0 %2757
      %2759 = vrot.lane.b32.xlu0 %v2026, 48
      %v2760 = vpop.permute.xlu0 %2759
      %2761 = vrot.lane.b32.xlu0 %v1959, 48
      %v2762 = vpop.permute.xlu0 %2761
      %2763 = vrot.lane.b32.xlu0 %v2027, 48
      %v2764 = vpop.permute.xlu0 %2763
      %2765 = vrot.lane.b32.xlu0 %v1962, 48
      %v2766 = vpop.permute.xlu0 %2765
      %2767 = vrot.lane.b32.xlu0 %v2028, 48
      %v2768 = vpop.permute.xlu0 %2767
      %2769 = vrot.lane.b32.xlu0 %v1965, 48
      %v2770 = vpop.permute.xlu0 %2769
      %2771 = vrot.lane.b32.xlu0 0.0, 48
      %v2772 = vpop.permute.xlu0 %2771
      %2804 = vrot.lane.b32.xlu0 %v2082, 56
      %v2805 = vpop.permute.xlu0 %2804
      %2806 = vrot.lane.b32.xlu0 %v2084, 56
      %v2807 = vpop.permute.xlu0 %2806
      %2808 = vrot.lane.b32.xlu0 %v2087, 56
      %v2809 = vpop.permute.xlu0 %2808
      %2810 = vrot.lane.b32.xlu0 %v2089, 56
      %v2811 = vpop.permute.xlu0 %2810
      %2812 = vrot.lane.b32.xlu0 %v2092, 56
      %v2813 = vpop.permute.xlu0 %2812
      %2814 = vrot.lane.b32.xlu0 %v2094, 56
      %v2815 = vpop.permute.xlu0 %2814
      %2816 = vrot.lane.b32.xlu0 %v2097, 56
      %v2817 = vpop.permute.xlu0 %2816
      %2818 = vrot.lane.b32.xlu0 %v2099, 56
      %v2819 = vpop.permute.xlu0 %2818
      %2820 = vrot.lane.b32.xlu0 %v2102, 56
      %v2821 = vpop.permute.xlu0 %2820
      %2822 = vrot.lane.b32.xlu0 %v2104, 56
      %v2823 = vpop.permute.xlu0 %2822
      %2824 = vrot.lane.b32.xlu0 %v2107, 56
      %v2825 = vpop.permute.xlu0 %2824
      %2826 = vrot.lane.b32.xlu0 %v2109, 56
      %v2827 = vpop.permute.xlu0 %2826
      %2828 = vrot.lane.b32.xlu0 %v2112, 56
      %v2829 = vpop.permute.xlu0 %2828
      %2830 = vrot.lane.b32.xlu0 %v2114, 56
      %v2831 = vpop.permute.xlu0 %2830
      %2832 = vrot.lane.b32.xlu0 %v2117, 56
      %v2833 = vpop.permute.xlu0 %2832
      %2834 = vrot.lane.b32.xlu0 %v2119, 56
      %v2835 = vpop.permute.xlu0 %2834
      %2836 = vrot.lane.b32.xlu0 %v2122, 56
      %v2837 = vpop.permute.xlu0 %2836
      %2838 = vrot.lane.b32.xlu0 %v2124, 56
      %v2839 = vpop.permute.xlu0 %2838
      %2840 = vrot.lane.b32.xlu0 %v2127, 56
      %v2841 = vpop.permute.xlu0 %2840
      %2842 = vrot.lane.b32.xlu0 %v2129, 56
      %v2843 = vpop.permute.xlu0 %2842
      %2844 = vrot.lane.b32.xlu0 %v2132, 56
      %v2845 = vpop.permute.xlu0 %2844
      %2846 = vrot.lane.b32.xlu0 %v2134, 56
      %v2847 = vpop.permute.xlu0 %2846
      %2848 = vrot.lane.b32.xlu0 %v2137, 56
      %v2849 = vpop.permute.xlu0 %2848
      %2850 = vrot.lane.b32.xlu0 %v2139, 56
      %v2851 = vpop.permute.xlu0 %2850
      %2852 = vrot.lane.b32.xlu0 %v2142, 56
      %v2853 = vpop.permute.xlu0 %2852
      %2854 = vrot.lane.b32.xlu0 %v2144, 56
      %v2855 = vpop.permute.xlu0 %2854
      %2856 = vrot.lane.b32.xlu0 %v2147, 56
      %v2857 = vpop.permute.xlu0 %2856
      %2858 = vrot.lane.b32.xlu0 %v2149, 56
      %v2859 = vpop.permute.xlu0 %2858
      %2860 = vrot.lane.b32.xlu0 %v2511, 56
      %v2861 = vpop.permute.xlu0 %2860
      %2862 = vrot.lane.b32.xlu0 %v2513, 56
      %v2863 = vpop.permute.xlu0 %2862
      %2864 = vrot.lane.b32.xlu0 %v450, 56
      %v2865 = vpop.permute.xlu0 %2864
      %2897 = vrot.lane.b32.xlu0 %v2250, 64
      %v2898 = vpop.permute.xlu0 %2897
      %2899 = vrot.lane.b32.xlu0 %v2252, 64
      %v2900 = vpop.permute.xlu0 %2899
      %2901 = vrot.lane.b32.xlu0 %v2255, 64
      %v2902 = vpop.permute.xlu0 %2901
      %2903 = vrot.lane.b32.xlu0 %v2257, 64
      %v2904 = vpop.permute.xlu0 %2903
      %2905 = vrot.lane.b32.xlu0 %v2260, 64
      %v2906 = vpop.permute.xlu0 %2905
      %2907 = vrot.lane.b32.xlu0 %v2262, 64
      %v2908 = vpop.permute.xlu0 %2907
      %2909 = vrot.lane.b32.xlu0 %v2265, 64
      %v2910 = vpop.permute.xlu0 %2909
      %2911 = vrot.lane.b32.xlu0 %v2267, 64
      %v2912 = vpop.permute.xlu0 %2911
      %2913 = vrot.lane.b32.xlu0 %v2270, 64
      %v2914 = vpop.permute.xlu0 %2913
      %2915 = vrot.lane.b32.xlu0 %v2272, 64
      %v2916 = vpop.permute.xlu0 %2915
      %2917 = vrot.lane.b32.xlu0 %v2275, 64
      %v2918 = vpop.permute.xlu0 %2917
      %2919 = vrot.lane.b32.xlu0 %v2277, 64
      %v2920 = vpop.permute.xlu0 %2919
      %2921 = vrot.lane.b32.xlu0 %v2280, 64
      %v2922 = vpop.permute.xlu0 %2921
      %2923 = vrot.lane.b32.xlu0 %v2282, 64
      %v2924 = vpop.permute.xlu0 %2923
      %2925 = vrot.lane.b32.xlu0 %v2285, 64
      %v2926 = vpop.permute.xlu0 %2925
      %2927 = vrot.lane.b32.xlu0 %v2287, 64
      %v2928 = vpop.permute.xlu0 %2927
      %2929 = vrot.lane.b32.xlu0 %v2290, 64
      %v2930 = vpop.permute.xlu0 %2929
      %2931 = vrot.lane.b32.xlu0 %v2292, 64
      %v2932 = vpop.permute.xlu0 %2931
      %2933 = vrot.lane.b32.xlu0 %v2295, 64
      %v2934 = vpop.permute.xlu0 %2933
      %2935 = vrot.lane.b32.xlu0 %v2297, 64
      %v2936 = vpop.permute.xlu0 %2935
      %2937 = vrot.lane.b32.xlu0 %v2300, 64
      %v2938 = vpop.permute.xlu0 %2937
      %2939 = vrot.lane.b32.xlu0 %v2302, 64
      %v2940 = vpop.permute.xlu0 %2939
      %2941 = vrot.lane.b32.xlu0 %v2305, 64
      %v2942 = vpop.permute.xlu0 %2941
      %2943 = vrot.lane.b32.xlu0 %v2307, 64
      %v2944 = vpop.permute.xlu0 %2943
      %2945 = vrot.lane.b32.xlu0 %v2310, 64
      %v2946 = vpop.permute.xlu0 %2945
      %2947 = vrot.lane.b32.xlu0 %v2312, 64
      %v2948 = vpop.permute.xlu0 %2947
      %2949 = vrot.lane.b32.xlu0 %v2315, 64
      %v2950 = vpop.permute.xlu0 %2949
      %2951 = vrot.lane.b32.xlu0 %v2317, 64
      %v2952 = vpop.permute.xlu0 %2951
      %2953 = vrot.lane.b32.xlu0 %v2612, 64
      %v2954 = vpop.permute.xlu0 %2953
      %2955 = vrot.lane.b32.xlu0 %v2614, 64
      %v2956 = vpop.permute.xlu0 %2955
      %2957 = vrot.lane.b32.xlu0 %v621, 64
      %v2958 = vpop.permute.xlu0 %2957
      %v2990 = vsel %vm1401, 0.0, %v2151
      %v2991 = vsel %vm1401, %v2013, %v2153
      %v2992 = vsel %vm1401, %v1920, %v2155
      %v2993 = vsel %vm1401, %v2014, %v2157
      %v2994 = vsel %vm1401, %v1923, %v2159
      %v2995 = vsel %vm1401, %v2015, %v2161
      %v2996 = vsel %vm1401, %v1926, %v2163
      %v2997 = vsel %vm1401, %v2016, %v2165
      %v2998 = vsel %vm1401, %v1929, %v2167
      %v2999 = vsel %vm1401, %v2017, %v2169
      %v3000 = vsel %vm1401, %v1932, %v2171
      %v3001 = vsel %vm1401, %v2018, %v2173
      %v3002 = vsel %vm1401, %v1935, %v2175
      %v3003 = vsel %vm1401, %v2019, %v2177
      %v3004 = vsel %vm1401, %v1938, %v2179
      %v3005 = vsel %vm1401, %v2020, %v2181
      %v3006 = vsel %vm1401, %v1941, %v2183
      %v3007 = vsel %vm1401, %v2021, %v2185
      %v3008 = vsel %vm1401, %v1944, %v2187
      %v3009 = vsel %vm1401, %v2022, %v2189
      %v3010 = vsel %vm1401, %v1947, %v2191
      %v3011 = vsel %vm1401, %v2023, %v2193
      %v3012 = vsel %vm1401, %v1950, %v2195
      %v3013 = vsel %vm1401, %v2024, %v2197
      %v3014 = vsel %vm1401, %v1953, %v2199
      %v3015 = vsel %vm1401, %v2025, %v2201
      %v3016 = vsel %vm1401, %v1956, %v2203
      %v3017 = vsel %vm1401, %v2026, %v2205
      %v3018 = vsel %vm1401, %v1959, %v2207
      %v3019 = vsel %vm1401, %v2027, %v2209
      %v3020 = vsel %vm1401, %v1962, %v2211
      %v3021 = vsel %vm1466, %v2990, %v2319
      %v3022 = vsel %vm1466, %v2991, %v2321
      %v3023 = vsel %vm1466, %v2992, %v2323
      %v3024 = vsel %vm1466, %v2993, %v2325
      %v3025 = vsel %vm1466, %v2994, %v2327
      %v3026 = vsel %vm1466, %v2995, %v2329
      %v3027 = vsel %vm1466, %v2996, %v2331
      %v3028 = vsel %vm1466, %v2997, %v2333
      %v3029 = vsel %vm1466, %v2998, %v2335
      %v3030 = vsel %vm1466, %v2999, %v2337
      %v3031 = vsel %vm1466, %v3000, %v2339
      %v3032 = vsel %vm1466, %v3001, %v2341
      %v3033 = vsel %vm1466, %v3002, %v2343
      %v3034 = vsel %vm1466, %v3003, %v2345
      %v3035 = vsel %vm1466, %v3004, %v2347
      %v3036 = vsel %vm1466, %v3005, %v2349
      %v3037 = vsel %vm1466, %v3006, %v2351
      %v3038 = vsel %vm1466, %v3007, %v2353
      %v3039 = vsel %vm1466, %v3008, %v2355
      %v3040 = vsel %vm1466, %v3009, %v2357
      %v3041 = vsel %vm1466, %v3010, %v2359
      %v3042 = vsel %vm1466, %v3011, %v2361
      %v3043 = vsel %vm1466, %v3012, %v2363
      %v3044 = vsel %vm1466, %v3013, %v2365
      %v3045 = vsel %vm1466, %v3014, %v2367
      %v3046 = vsel %vm1466, %v3015, %v2369
      %v3047 = vsel %vm1466, %v3016, %v2371
      %v3048 = vsel %vm1466, %v3017, %v2373
      %v3049 = vsel %vm1466, %v3018, %v2375
      %v3050 = vsel %vm1466, %v3019, %v2377
      %v3051 = vsel %vm1466, %v3020, %v2379
      %v3052 = vsel %vm1532, %v3021, %v2413
      %v3053 = vsel %vm1532, %v3021, %v2415
      %v3054 = vsel %vm1532, %v3022, %v2417
      %v3055 = vsel %vm1532, %v3023, %v2419
      %v3056 = vsel %vm1532, %v3024, %v2421
      %v3057 = vsel %vm1532, %v3025, %v2423
      %v3058 = vsel %vm1532, %v3026, %v2425
      %v3059 = vsel %vm1532, %v3027, %v2427
      %v3060 = vsel %vm1532, %v3028, %v2429
      %v3061 = vsel %vm1532, %v3029, %v2431
      %v3062 = vsel %vm1532, %v3030, %v2433
      %v3063 = vsel %vm1532, %v3031, %v2435
      %v3064 = vsel %vm1532, %v3032, %v2437
      %v3065 = vsel %vm1532, %v3033, %v2439
      %v3066 = vsel %vm1532, %v3034, %v2441
      %v3067 = vsel %vm1532, %v3035, %v2443
      %v3068 = vsel %vm1532, %v3036, %v2445
      %v3069 = vsel %vm1532, %v3037, %v2447
      %v3070 = vsel %vm1532, %v3038, %v2449
      %v3071 = vsel %vm1532, %v3039, %v2451
      %v3072 = vsel %vm1532, %v3040, %v2453
      %v3073 = vsel %vm1532, %v3041, %v2455
      %v3074 = vsel %vm1532, %v3042, %v2457
      %v3075 = vsel %vm1532, %v3043, %v2459
      %v3076 = vsel %vm1532, %v3044, %v2461
      %v3077 = vsel %vm1532, %v3045, %v2463
      %v3078 = vsel %vm1532, %v3046, %v2465
      %v3079 = vsel %vm1532, %v3047, %v2467
      %v3080 = vsel %vm1532, %v3048, %v2469
      %v3081 = vsel %vm1532, %v3049, %v2471
      %v3082 = vsel %vm1532, %v3050, %v2473
      %v3083 = vsel %vm1532, %v3051, %v2475
      %v3084 = vsel %vm1598, %v3052, %v2515
      %v3085 = vsel %vm1598, %v3053, %v2517
      %v3086 = vsel %vm1598, %v3054, %v2519
      %v3087 = vsel %vm1598, %v3055, %v2521
      %v3088 = vsel %vm1598, %v3056, %v2523
      %v3089 = vsel %vm1598, %v3057, %v2525
      %v3090 = vsel %vm1598, %v3058, %v2527
      %v3091 = vsel %vm1598, %v3059, %v2529
      %v3092 = vsel %vm1598, %v3060, %v2531
      %v3093 = vsel %vm1598, %v3061, %v2533
      %v3094 = vsel %vm1598, %v3062, %v2535
      %v3095 = vsel %vm1598, %v3063, %v2537
      %v3096 = vsel %vm1598, %v3064, %v2539
      %v3097 = vsel %vm1598, %v3065, %v2541
      %v3098 = vsel %vm1598, %v3066, %v2543
      %v3099 = vsel %vm1598, %v3067, %v2545
      %v3100 = vsel %vm1598, %v3068, %v2547
      %v3101 = vsel %vm1598, %v3069, %v2549
      %v3102 = vsel %vm1598, %v3070, %v2551
      %v3103 = vsel %vm1598, %v3071, %v2553
      %v3104 = vsel %vm1598, %v3072, %v2555
      %v3105 = vsel %vm1598, %v3073, %v2557
      %v3106 = vsel %vm1598, %v3074, %v2559
      %v3107 = vsel %vm1598, %v3075, %v2561
      %v3108 = vsel %vm1598, %v3076, %v2563
      %v3109 = vsel %vm1598, %v3077, %v2565
      %v3110 = vsel %vm1598, %v3078, %v2567
      %v3111 = vsel %vm1598, %v3079, %v2569
      %v3112 = vsel %vm1598, %v3080, %v2571
      %v3113 = vsel %vm1598, %v3081, %v2573
      %v3114 = vsel %vm1598, %v3082, %v2575
      %v3115 = vsel %vm1598, %v3083, %v2577
      %vm3116 = vcmask 326656
      %v3117 = vsel %vm3116, %v3084, %v2616
      %v3118 = vsel %vm3116, %v3085, %v2618
      %v3119 = vsel %vm3116, %v3086, %v2620
      %v3120 = vsel %vm3116, %v3087, %v2622
      %v3121 = vsel %vm3116, %v3088, %v2624
      %v3122 = vsel %vm3116, %v3089, %v2626
      %v3123 = vsel %vm3116, %v3090, %v2628
      %v3124 = vsel %vm3116, %v3091, %v2630
      %v3125 = vsel %vm3116, %v3092, %v2632
      %v3126 = vsel %vm3116, %v3093, %v2634
      %v3127 = vsel %vm3116, %v3094, %v2636
      %v3128 = vsel %vm3116, %v3095, %v2638
      %v3129 = vsel %vm3116, %v3096, %v2640
      %v3130 = vsel %vm3116, %v3097, %v2642
      %v3131 = vsel %vm3116, %v3098, %v2644
      %v3132 = vsel %vm3116, %v3099, %v2646
      %v3133 = vsel %vm3116, %v3100, %v2648
      %v3134 = vsel %vm3116, %v3101, %v2650
      %v3135 = vsel %vm3116, %v3102, %v2652
      %v3136 = vsel %vm3116, %v3103, %v2654
      %v3137 = vsel %vm3116, %v3104, %v2656
      %v3138 = vsel %vm3116, %v3105, %v2658
      %v3139 = vsel %vm3116, %v3106, %v2660
      %v3140 = vsel %vm3116, %v3107, %v2662
      %v3141 = vsel %vm3116, %v3108, %v2664
      %v3142 = vsel %vm3116, %v3109, %v2666
      %v3143 = vsel %vm3116, %v3110, %v2668
      %v3144 = vsel %vm3116, %v3111, %v2670
      %v3145 = vsel %vm3116, %v3112, %v2672
      %v3146 = vsel %vm3116, %v3113, %v2674
      %v3147 = vsel %vm3116, %v3114, %v2676
      %v3148 = vsel %vm3116, %v3115, %v2678
      %vm3149 = vcmask 392192
      %v3150 = vsel %vm3149, %v3117, %v2712
      %v3151 = vsel %vm3149, %v3118, %v2714
      %v3152 = vsel %vm3149, %v3119, %v2716
      %v3153 = vsel %vm3149, %v3120, %v2718
      %v3154 = vsel %vm3149, %v3121, %v2720
      %v3155 = vsel %vm3149, %v3122, %v2722
      %v3156 = vsel %vm3149, %v3123, %v2724
      %v3157 = vsel %vm3149, %v3124, %v2726
      %v3158 = vsel %vm3149, %v3125, %v2728
      %v3159 = vsel %vm3149, %v3126, %v2730
      %v3160 = vsel %vm3149, %v3127, %v2732
      %v3161 = vsel %vm3149, %v3128, %v2734
      %v3162 = vsel %vm3149, %v3129, %v2736
      %v3163 = vsel %vm3149, %v3130, %v2738
      %v3164 = vsel %vm3149, %v3131, %v2740
      %v3165 = vsel %vm3149, %v3132, %v2742
      %v3166 = vsel %vm3149, %v3133, %v2744
      %v3167 = vsel %vm3149, %v3134, %v2746
      %v3168 = vsel %vm3149, %v3135, %v2748
      %v3169 = vsel %vm3149, %v3136, %v2750
      %v3170 = vsel %vm3149, %v3137, %v2752
      %v3171 = vsel %vm3149, %v3138, %v2754
      %v3172 = vsel %vm3149, %v3139, %v2756
      %v3173 = vsel %vm3149, %v3140, %v2758
      %v3174 = vsel %vm3149, %v3141, %v2760
      %v3175 = vsel %vm3149, %v3142, %v2762
      %v3176 = vsel %vm3149, %v3143, %v2764
      %v3177 = vsel %vm3149, %v3144, %v2766
      %v3178 = vsel %vm3149, %v3145, %v2768
      %v3179 = vsel %vm3149, %v3146, %v2770
      %v3180 = vsel %vm3149, %v3147, %v2772
      %v3181 = vsel %vm3149, %v3148, %v2772
      %vm3182 = vcmask 457728
      %v3183 = vsel %vm3182, %v3150, %v2805
      %v3184 = vsel %vm3182, %v3151, %v2807
      %v3185 = vsel %vm3182, %v3152, %v2809
      %v3186 = vsel %vm3182, %v3153, %v2811
      %v3187 = vsel %vm3182, %v3154, %v2813
      %v3188 = vsel %vm3182, %v3155, %v2815
      %v3189 = vsel %vm3182, %v3156, %v2817
      %v3190 = vsel %vm3182, %v3157, %v2819
      %v3191 = vsel %vm3182, %v3158, %v2821
      %v3192 = vsel %vm3182, %v3159, %v2823
      %v3193 = vsel %vm3182, %v3160, %v2825
      %v3194 = vsel %vm3182, %v3161, %v2827
      %v3195 = vsel %vm3182, %v3162, %v2829
      %v3196 = vsel %vm3182, %v3163, %v2831
      %v3197 = vsel %vm3182, %v3164, %v2833
      %v3198 = vsel %vm3182, %v3165, %v2835
      %v3199 = vsel %vm3182, %v3166, %v2837
      %v3200 = vsel %vm3182, %v3167, %v2839
      %v3201 = vsel %vm3182, %v3168, %v2841
      %v3202 = vsel %vm3182, %v3169, %v2843
      %v3203 = vsel %vm3182, %v3170, %v2845
      %v3204 = vsel %vm3182, %v3171, %v2847
      %v3205 = vsel %vm3182, %v3172, %v2849
      %v3206 = vsel %vm3182, %v3173, %v2851
      %v3207 = vsel %vm3182, %v3174, %v2853
      %v3208 = vsel %vm3182, %v3175, %v2855
      %v3209 = vsel %vm3182, %v3176, %v2857
      %v3210 = vsel %vm3182, %v3177, %v2859
      %v3211 = vsel %vm3182, %v3178, %v2861
      %v3212 = vsel %vm3182, %v3179, %v2863
      %v3213 = vsel %vm3182, %v3180, %v2865
      %v3214 = vsel %vm3182, %v3181, %v2865
      %vm3215 = vcmask 523264
      %v3216 = vsel %vm3215, %v3183, %v2898
      %v3217 = vsel %vm3215, %v3184, %v2900
      %v3218 = vsel %vm3215, %v3185, %v2902
      %v3219 = vsel %vm3215, %v3186, %v2904
      %v3220 = vsel %vm3215, %v3187, %v2906
      %v3221 = vsel %vm3215, %v3188, %v2908
      %v3222 = vsel %vm3215, %v3189, %v2910
      %v3223 = vsel %vm3215, %v3190, %v2912
      %v3224 = vsel %vm3215, %v3191, %v2914
      %v3225 = vsel %vm3215, %v3192, %v2916
      %v3226 = vsel %vm3215, %v3193, %v2918
      %v3227 = vsel %vm3215, %v3194, %v2920
      %v3228 = vsel %vm3215, %v3195, %v2922
      %v3229 = vsel %vm3215, %v3196, %v2924
      %v3230 = vsel %vm3215, %v3197, %v2926
      %v3231 = vsel %vm3215, %v3198, %v2928
      %v3232 = vsel %vm3215, %v3199, %v2930
      %v3233 = vsel %vm3215, %v3200, %v2932
      %v3234 = vsel %vm3215, %v3201, %v2934
      %v3235 = vsel %vm3215, %v3202, %v2936
      %v3236 = vsel %vm3215, %v3203, %v2938
      %v3237 = vsel %vm3215, %v3204, %v2940
      %v3238 = vsel %vm3215, %v3205, %v2942
      %v3239 = vsel %vm3215, %v3206, %v2944
      %v3240 = vsel %vm3215, %v3207, %v2946
      %v3241 = vsel %vm3215, %v3208, %v2948
      %v3242 = vsel %vm3215, %v3209, %v2950
      %v3243 = vsel %vm3215, %v3210, %v2952
      %v3244 = vsel %vm3215, %v3211, %v2954
      %v3245 = vsel %vm3215, %v3212, %v2956
      %v3246 = vsel %vm3215, %v3213, %v2958
      %v3247 = vsel %vm3215, %v3214, %v2958
      %v3248 = vld [vmem:[%s3] sm:$0xff]
      %v3249 = vld [vmem:[%s3 + $0x8] sm:$0xff]
      %v3250 = vld [vmem:[%s3 + $0x10] sm:$0xff]
      %v3251 = vld [vmem:[%s3 + $0x18] sm:$0xff]
      %v3252 = vld [vmem:[%s3 + $0x20] sm:$0xff]
      %v3253 = vld [vmem:[%s3 + $0x28] sm:$0xff]
      %v3254 = vld [vmem:[%s3 + $0x30] sm:$0xff]
      %v3255 = vld [vmem:[%s3 + $0x38] sm:$0xff]
      %v3256 = vld [vmem:[%s3 + $0x40] sm:$0xff]
      %v3257 = vld [vmem:[%s4] sm:$0x1]
      %v3259 = vperm.slane %v3257, 0
      %vm3261 = vcmask 588800
      %v3263 = vsel %vm3261, %v3216, 0
      %v3266 = vsel %vm3261, %v3217, 0
      %v3269 = vsel %vm3261, %v3218, 0
      %v3272 = vsel %vm3261, %v3219, 0
      %v3275 = vsel %vm3261, %v3220, 0
      %v3278 = vsel %vm3261, %v3221, 0
      %v3281 = vsel %vm3261, %v3222, 0
      %v3284 = vsel %vm3261, %v3223, 0
      %v3287 = vsel %vm3261, %v3224, 0
      %v3290 = vsel %vm3261, %v3225, 0
      %v3293 = vsel %vm3261, %v3226, 0
      %v3296 = vsel %vm3261, %v3227, 0
      %v3299 = vsel %vm3261, %v3228, 0
      %v3302 = vsel %vm3261, %v3229, 0
      %v3305 = vsel %vm3261, %v3230, 0
      %v3308 = vsel %vm3261, %v3231, 0
      %v3311 = vsel %vm3261, %v3232, 0
      %v3314 = vsel %vm3261, %v3233, 0
      %v3317 = vsel %vm3261, %v3234, 0
      %v3320 = vsel %vm3261, %v3235, 0
      %v3323 = vsel %vm3261, %v3236, 0
      %v3326 = vsel %vm3261, %v3237, 0
      %v3329 = vsel %vm3261, %v3238, 0
      %v3332 = vsel %vm3261, %v3239, 0
      %v3335 = vsel %vm3261, %v3240, 0
      %v3338 = vsel %vm3261, %v3241, 0
      %v3341 = vsel %vm3261, %v3242, 0
      %v3344 = vsel %vm3261, %v3243, 0
      %v3347 = vsel %vm3261, %v3244, 0
      %v3350 = vsel %vm3261, %v3245, 0
      %v3353 = vsel %vm3261, %v3246, 0
      %v3356 = vsel %vm3261, %v3247, 0
      %3358 = vmatpush.msra.mxu0 0.0
      %3359 = vmatpush.msra.mxu0 0.0
      %3360 = vmatpush.msra.mxu0 0.0
      %3361 = vmatpush.msra.mxu0 0.0
      %3362 = vmatpush.msra.mxu0 0.0
      %3363 = vmatpush.msra.mxu0 0.0
      %3364 = vmatpush.msra.mxu0 0.0
      %3365 = vmatpush.msra.mxu0 %v3256
      %3366 = vmatpush.msra.mxu0 %v3255
      %3367 = vmatpush.msra.mxu0 %v3254
      %3368 = vmatpush.msra.mxu0 %v3253
      %3369 = vmatpush.msra.mxu0 %v3252
      %3370 = vmatpush.msra.mxu0 %v3251
      %3371 = vmatpush.msra.mxu0 %v3250
      %3372 = vmatpush.msra.mxu0 %v3249
      %3373 = vmatpush.msra.mxu0 %v3248
      %3374 = vmatmul.f32.gmra.mxu0 %v3263
      %v3375 = vpop.f32.mrf.mxu0
      %v3376 = vadd.f32 %v3259, %v3375
      %3377 = vmatmul.f32.gmra.mxu0 %v3266
      %v3378 = vpop.f32.mrf.mxu0
      %v3379 = vadd.f32 %v3259, %v3378
      %3380 = vmatmul.f32.gmra.mxu0 %v3269
      %v3381 = vpop.f32.mrf.mxu0
      %v3382 = vadd.f32 %v3259, %v3381
      %3383 = vmatmul.f32.gmra.mxu0 %v3272
      %v3384 = vpop.f32.mrf.mxu0
      %v3385 = vadd.f32 %v3259, %v3384
      %3386 = vmatmul.f32.gmra.mxu0 %v3275
      %v3387 = vpop.f32.mrf.mxu0
      %v3388 = vadd.f32 %v3259, %v3387
      %3389 = vmatmul.f32.gmra.mxu0 %v3278
      %v3390 = vpop.f32.mrf.mxu0
      %v3391 = vadd.f32 %v3259, %v3390
      %3392 = vmatmul.f32.gmra.mxu0 %v3281
      %v3393 = vpop.f32.mrf.mxu0
      %v3394 = vadd.f32 %v3259, %v3393
      %3395 = vmatmul.f32.gmra.mxu0 %v3284
      %v3396 = vpop.f32.mrf.mxu0
      %v3397 = vadd.f32 %v3259, %v3396
      %3398 = vmatmul.f32.gmra.mxu0 %v3287
      %v3399 = vpop.f32.mrf.mxu0
      %v3400 = vadd.f32 %v3259, %v3399
      %3401 = vmatmul.f32.gmra.mxu0 %v3290
      %v3402 = vpop.f32.mrf.mxu0
      %v3403 = vadd.f32 %v3259, %v3402
      %3404 = vmatmul.f32.gmra.mxu0 %v3293
      %v3405 = vpop.f32.mrf.mxu0
      %v3406 = vadd.f32 %v3259, %v3405
      %3407 = vmatmul.f32.gmra.mxu0 %v3296
      %v3408 = vpop.f32.mrf.mxu0
      %v3409 = vadd.f32 %v3259, %v3408
      %3410 = vmatmul.f32.gmra.mxu0 %v3299
      %v3411 = vpop.f32.mrf.mxu0
      %v3412 = vadd.f32 %v3259, %v3411
      %3413 = vmatmul.f32.gmra.mxu0 %v3302
      %v3414 = vpop.f32.mrf.mxu0
      %v3415 = vadd.f32 %v3259, %v3414
      %3416 = vmatmul.f32.gmra.mxu0 %v3305
      %v3417 = vpop.f32.mrf.mxu0
      %v3418 = vadd.f32 %v3259, %v3417
      %3419 = vmatmul.f32.gmra.mxu0 %v3308
      %v3420 = vpop.f32.mrf.mxu0
      %v3421 = vadd.f32 %v3259, %v3420
      %3422 = vmatmul.f32.gmra.mxu0 %v3311
      %v3423 = vpop.f32.mrf.mxu0
      %v3424 = vadd.f32 %v3259, %v3423
      %3425 = vmatmul.f32.gmra.mxu0 %v3314
      %v3426 = vpop.f32.mrf.mxu0
      %v3427 = vadd.f32 %v3259, %v3426
      %3428 = vmatmul.f32.gmra.mxu0 %v3317
      %v3429 = vpop.f32.mrf.mxu0
      %v3430 = vadd.f32 %v3259, %v3429
      %3431 = vmatmul.f32.gmra.mxu0 %v3320
      %v3432 = vpop.f32.mrf.mxu0
      %v3433 = vadd.f32 %v3259, %v3432
      %3434 = vmatmul.f32.gmra.mxu0 %v3323
      %v3435 = vpop.f32.mrf.mxu0
      %v3436 = vadd.f32 %v3259, %v3435
      %3437 = vmatmul.f32.gmra.mxu0 %v3326
      %v3438 = vpop.f32.mrf.mxu0
      %v3439 = vadd.f32 %v3259, %v3438
      %3440 = vmatmul.f32.gmra.mxu0 %v3329
      %v3441 = vpop.f32.mrf.mxu0
      %v3442 = vadd.f32 %v3259, %v3441
      %3443 = vmatmul.f32.gmra.mxu0 %v3332
      %v3444 = vpop.f32.mrf.mxu0
      %v3445 = vadd.f32 %v3259, %v3444
      %3446 = vmatmul.f32.gmra.mxu0 %v3335
      %v3447 = vpop.f32.mrf.mxu0
      %v3448 = vadd.f32 %v3259, %v3447
      %3449 = vmatmul.f32.gmra.mxu0 %v3338
      %v3450 = vpop.f32.mrf.mxu0
      %v3451 = vadd.f32 %v3259, %v3450
      %3452 = vmatmul.f32.gmra.mxu0 %v3341
      %v3453 = vpop.f32.mrf.mxu0
      %v3454 = vadd.f32 %v3259, %v3453
      %3455 = vmatmul.f32.gmra.mxu0 %v3344
      %v3456 = vpop.f32.mrf.mxu0
      %v3457 = vadd.f32 %v3259, %v3456
      %3458 = vmatmul.f32.gmra.mxu0 %v3347
      %v3459 = vpop.f32.mrf.mxu0
      %v3460 = vadd.f32 %v3259, %v3459
      %3461 = vmatmul.f32.gmra.mxu0 %v3350
      %v3462 = vpop.f32.mrf.mxu0
      %v3463 = vadd.f32 %v3259, %v3462
      %3464 = vmatmul.f32.gmra.mxu0 %v3353
      %v3465 = vpop.f32.mrf.mxu0
      %v3466 = vadd.f32 %v3259, %v3465
      %3467 = vmatmul.f32.gmra.mxu0 %v3356
      %v3468 = vpop.f32.mrf.mxu0
      %v3469 = vadd.f32 %v3259, %v3468
      %3470 = vdwg.mxu0
      %v3471 = vmax.f32 %v3376, 0.0
      %v3472 = vmax.f32 %v3379, 0.0
      %v3473 = vmax.f32 %v3382, 0.0
      %v3474 = vmax.f32 %v3385, 0.0
      %v3475 = vmax.f32 %v3388, 0.0
      %v3476 = vmax.f32 %v3391, 0.0
      %v3477 = vmax.f32 %v3394, 0.0
      %v3478 = vmax.f32 %v3397, 0.0
      %v3479 = vmax.f32 %v3400, 0.0
      %v3480 = vmax.f32 %v3403, 0.0
      %v3481 = vmax.f32 %v3406, 0.0
      %v3482 = vmax.f32 %v3409, 0.0
      %v3483 = vmax.f32 %v3412, 0.0
      %v3484 = vmax.f32 %v3415, 0.0
      %v3485 = vmax.f32 %v3418, 0.0
      %v3486 = vmax.f32 %v3421, 0.0
      %v3487 = vmax.f32 %v3424, 0.0
      %v3488 = vmax.f32 %v3427, 0.0
      %v3489 = vmax.f32 %v3430, 0.0
      %v3490 = vmax.f32 %v3433, 0.0
      %v3491 = vmax.f32 %v3436, 0.0
      %v3492 = vmax.f32 %v3439, 0.0
      %v3493 = vmax.f32 %v3442, 0.0
      %v3494 = vmax.f32 %v3445, 0.0
      %v3495 = vmax.f32 %v3448, 0.0
      %v3496 = vmax.f32 %v3451, 0.0
      %v3497 = vmax.f32 %v3454, 0.0
      %v3498 = vmax.f32 %v3457, 0.0
      %v3499 = vmax.f32 %v3460, 0.0
      %v3500 = vmax.f32 %v3463, 0.0
      %v3501 = vmax.f32 %v3466, 0.0
      %v3502 = vmax.f32 %v3469, 0.0
      %3503 = vst.msk [vmem:[%s224] sm:$0xff] %vm1401, %v3471
      %3504 = vst.msk [vmem:[%s224 + $0x8] sm:$0xff] %vm1401, %v3472
      %3505 = vst.msk [vmem:[%s224 + $0x10] sm:$0xff] %vm1401, %v3473
      %3506 = vst.msk [vmem:[%s224 + $0x18] sm:$0xff] %vm1401, %v3474
      %3507 = vst.msk [vmem:[%s224 + $0x20] sm:$0xff] %vm1401, %v3475
      %3508 = vst.msk [vmem:[%s224 + $0x28] sm:$0xff] %vm1401, %v3476
      %3509 = vst.msk [vmem:[%s224 + $0x30] sm:$0xff] %vm1401, %v3477
      %3510 = vst.msk [vmem:[%s224 + $0x38] sm:$0xff] %vm1401, %v3478
      %3511 = vst.msk [vmem:[%s224 + $0x40] sm:$0xff] %vm1401, %v3479
      %3512 = vst.msk [vmem:[%s224 + $0x48] sm:$0xff] %vm1401, %v3480
      %3513 = vst.msk [vmem:[%s224 + $0x50] sm:$0xff] %vm1401, %v3481
      %3514 = vst.msk [vmem:[%s224 + $0x58] sm:$0xff] %vm1401, %v3482
      %3515 = vst.msk [vmem:[%s224 + $0x60] sm:$0xff] %vm1401, %v3483
      %3516 = vst.msk [vmem:[%s224 + $0x68] sm:$0xff] %vm1401, %v3484
      %3517 = vst.msk [vmem:[%s224 + $0x70] sm:$0xff] %vm1401, %v3485
      %3518 = vst.msk [vmem:[%s224 + $0x78] sm:$0xff] %vm1401, %v3486
      %3519 = vst.msk [vmem:[%s224 + $0x80] sm:$0xff] %vm1401, %v3487
      %3520 = vst.msk [vmem:[%s224 + $0x88] sm:$0xff] %vm1401, %v3488
      %3521 = vst.msk [vmem:[%s224 + $0x90] sm:$0xff] %vm1401, %v3489
      %3522 = vst.msk [vmem:[%s224 + $0x98] sm:$0xff] %vm1401, %v3490
      %3523 = vst.msk [vmem:[%s224 + $0xa0] sm:$0xff] %vm1401, %v3491
      %3524 = vst.msk [vmem:[%s224 + $0xa8] sm:$0xff] %vm1401, %v3492
      %3525 = vst.msk [vmem:[%s224 + $0xb0] sm:$0xff] %vm1401, %v3493
      %3526 = vst.msk [vmem:[%s224 + $0xb8] sm:$0xff] %vm1401, %v3494
      %3527 = vst.msk [vmem:[%s224 + $0xc0] sm:$0xff] %vm1401, %v3495
      %3528 = vst.msk [vmem:[%s224 + $0xc8] sm:$0xff] %vm1401, %v3496
      %3529 = vst.msk [vmem:[%s224 + $0xd0] sm:$0xff] %vm1401, %v3497
      %3530 = vst.msk [vmem:[%s224 + $0xd8] sm:$0xff] %vm1401, %v3498
      %3531 = vst.msk [vmem:[%s224 + $0xe0] sm:$0xff] %vm1401, %v3499
      %3532 = vst.msk [vmem:[%s224 + $0xe8] sm:$0xff] %vm1401, %v3500
      %3533 = vst.msk [vmem:[%s224 + $0xf0] sm:$0xff] %vm1401, %v3501
      %3534 = vst.msk [vmem:[%s224 + $0xf8] sm:$0xff] %vm1401, %v3502
      %p3535 = scmp.lt.s32.totalorder %s16, 1
      %s3536 = scalar_select %p3535, %s16, 1
      %s3537 = smul.addr %s3536, 32
      %s3538 = smul.addr %s3537, 8
      %s3539 = scalar_lea.vmem %s5, %s3538
      // Predicated region
      $region41: #{tpu_custom_call.1} parent=39 // pred_check
        %p3540 = pneg %p144
      $region42: #{tpu_custom_call.1} parent=39 // pred_check_branch
        %3542 = sbr.rel (%p3540) target = $region44
      $region43: #{tpu_custom_call.1} parent=39 // pred_region
        _
      $region44: #{tpu_custom_call.1} parent=39 // pred_fallthru
        _
    $region40: #{tpu_custom_call.1} parent=5 // pred_fallthru
      _
    %p3543 = scmp.le.s32.totalorder 2, %s11
    // Predicated region
    $region45: #{tpu_custom_call.1} parent=5 // pred_check
      %p3544 = pneg %p3543
    $region46: #{tpu_custom_call.1} parent=5 // pred_check_branch
      %3546 = sbr.rel (%p3544) target = $region48
    $region47: #{tpu_custom_call.1} parent=5 // pred_region
      %s3547 = ssub.s32 %s11, 2
      // Predicated region
      $region49: #{tpu_custom_call.1} parent=47 // pred_check
        %p3548 = pneg %p150
      $region50: #{tpu_custom_call.1} parent=47 // pred_check_branch
        %3550 = sbr.rel (%p3548) target = $region52
      $region51: #{tpu_custom_call.1} parent=47 // pred_region
        %p3551 = scmp.lt.s32.totalorder %s17, 1
        %s3552 = scalar_select %p3551, %s17, 1
        %s3553 = smul.addr %s3552, 32
        %s3554 = smul.addr %s3553, 8
        %s3555 = scalar_lea.vmem %s5, %s3554
      $region52: #{tpu_custom_call.1} parent=47 // pred_fallthru
        _
    $region48: #{tpu_custom_call.1} parent=5 // pred_fallthru
      _
  $region6: #{tpu_custom_call.1} parent=0 // loop_footer
    %s15 = sadd.s32 1, %s11
  $region7: #{tpu_custom_call.1} parent=0 // loop_footer_branch
    %10 = sbr.rel target = $region3
  $region8: #{tpu_custom_call.1} parent=0 // loop_exit
    _

</llo_original>
